<compile_context>
chip_gen: v7x
topology: tpu7x:2x2x1
jax: 0.10.0
libtpu: 0.0.40
codegen_flags: <defaults>
</compile_context>

<pallas_src>
import jax
import jax.numpy as jnp
import numpy as np
from jax import lax
from jax.experimental import pallas as pl
from jax.experimental.pallas import tpu as pltpu


def _round_up(x, m):
    return -(-x // m) * m


def _cdiv(a, b):
    return -(-a // b)


# --------------------------------------------------------------------------- #
# Kernel
# --------------------------------------------------------------------------- #
def _nerf_kernel(x_ref, w1, b1, w2, b2, wc, bc, w4d, wa, w5, b5, wr4, br4,
                 out_ref):
    """One row-tile of the ReplicateNeRFModel forward.

    x_ref : (tile, dim_xyz + dim_dir) bf16, xyz || direction in one block.
    Weight matrices are bf16 (in, out); biases / alpha row are f32 (1, out).
      w1  : layer1 weight zero-padded over the direction lanes  (feat_in, hidden)
      wc  : w3 @ w4[:hidden]   (layer3 folded into layer4)      (hidden, half)
      bc  : b4 + b3 @ w4[:hidden]                               (1, half)
      w4d : direction part of layer4, zero-padded over xyz lanes(feat_in, half)
      wa  : fc_alpha weight as a row                            (1, hidden)
      wr4 : fc_rgb weight with a zero alpha column              (half, 4)
      br4 : [fc_rgb bias | fc_alpha bias]                       (1, 4)
    """
    f32 = jnp.float32
    bf16 = jnp.bfloat16

    x = x_ref[...]                                      # bf16 MXU operand

    # h = relu(layer1(xyz)) ; h = relu(layer2(h))  (f32 accumulate/bias/relu)
    h = jnp.dot(x, w1[...], preferred_element_type=f32) + b1[...]
    h = jnp.maximum(h, 0.0)
    h = jnp.dot(h.astype(bf16), w2[...], preferred_element_type=f32) + b2[...]
    h = jnp.maximum(h, 0.0)

    # fc_alpha(h) without its bias: VPU broadcast-mul + XLU row-reduce in f32.
    alpha = jnp.sum(h * wa[...], axis=-1, keepdims=True)        # (tile, 1)

    # Folded layer3 -> layer4 (layer3 output has no activation -> exact algebra).
    z = (jnp.dot(h.astype(bf16), wc[...], preferred_element_type=f32)
         + jnp.dot(x, w4d[...], preferred_element_type=f32)
         + bc[...])
    y = jnp.maximum(z, 0.0)

    # y = relu(layer5(y)) ; rgba = fc_rgb(y) with alpha folded into lane 3.
    y = jnp.dot(y.astype(bf16), w5[...], preferred_element_type=f32) + b5[...]
    y = jnp.maximum(y, 0.0)
    rgba = jnp.dot(y.astype(bf16), wr4[...], preferred_element_type=f32) + br4[...]

    lane = lax.broadcasted_iota(jnp.int32, (1, 4), 1)
    out_ref[...] = rgba + alpha * (lane == 3).astype(f32)       # single store


# --------------------------------------------------------------------------- #
# Wrapper
# --------------------------------------------------------------------------- #
def prepare_params(params, *, dim_xyz, dim_dir):
    """One-time weight folding + bf16 cast; keep out of the per-call path."""
    (w1, b1, w2, b2, w3, b3, wa, ba, w4, b4, w5, b5, wr, br) = params
    hidden = w1.shape[1]
    f32, bf16 = jnp.float32, jnp.bfloat16

    w4f, w4d = w4[:hidden, :], w4[hidden:, :]
    wc = w3 @ w4f                                    # (hidden, half)
    bc = b4 + b3 @ w4f                               # (1, half)
    w1p = jnp.pad(w1, ((0, dim_dir), (0, 0)))        # zero over direction lanes
    w4dp = jnp.pad(w4d, ((dim_xyz, 0), (0, 0)))      # zero over xyz lanes
    wr4 = jnp.pad(wr, ((0, 0), (0, 1)))              # (half, 4), zero alpha col
    br4 = jnp.concatenate((br, ba), axis=1)          # (1, 4): [rgb bias | alpha bias]
    wa_row = jnp.transpose(wa)                       # (1, hidden)

    return (w1p.astype(bf16), b1.astype(f32),
            w2.astype(bf16), b2.astype(f32),
            wc.astype(bf16), bc.astype(f32),
            w4dp.astype(bf16),
            wa_row.astype(f32),
            w5.astype(bf16), b5.astype(f32),
            wr4.astype(bf16), br4.astype(f32))


def _tensorcores_per_chip():
    """2 for chips whose TensorCores share the 'parallel' grid axis, else 1."""
    try:
        kind = jax.devices()[0].device_kind.lower()
    except Exception:
        return 1
    return 2 if any(t in kind for t in ("v7", "7x", "v4", "v5p")) else 1


def _choose_tiling(n, tile_m, num_tc):
    """Big tiles; only split into balanced even step counts on multi-TC chips."""
    n128 = _round_up(max(n, 1), 128)
    tile = max(128, min(_round_up(int(tile_m), 128), n128))
    steps = _cdiv(n128, tile)
    if num_tc > 1 and n128 >= num_tc * 128:
        steps = _round_up(max(steps, num_tc), num_tc)
        tile = _round_up(_cdiv(n128, steps), 128)
        steps = _cdiv(n128, tile)
        if steps % num_tc:
            steps = _round_up(steps, num_tc)
    return tile, steps, tile * steps


def replicate_nerf_forward(x, prepared, *, dim_xyz, dim_dir, tile_m=1024):
    """x: (..., dim_xyz + dim_dir). Returns (..., 4), matching the module."""
    orig_shape = x.shape
    feat_in = dim_xyz + dim_dir
    assert orig_shape[-1] == feat_in
    n = int(np.prod(orig_shape[:-1]))

    # Only O(N) input: stream it in bf16 (the kernel computes in bf16 anyway).
    x2 = x.reshape(n, feat_in).astype(jnp.bfloat16)

    hidden = prepared[0].shape[1]
    half = hidden // 2

    num_tc = _tensorcores_per_chip()
    tile, steps, n_pad = _choose_tiling(n, tile_m, num_tc)
    if n_pad != n:
        x2 = jnp.pad(x2, ((0, n_pad - n), (0, 0)))

    flops_per_row = 2 * (feat_in * hidden + hidden * hidden + hidden
                         + hidden * half + feat_in * half
                         + half * half + half * 4)
    weight_bytes = sum(int(np.prod(a.shape)) * a.dtype.itemsize for a in prepared)
    cost = pl.CostEstimate(
        flops=flops_per_row * n_pad,
        transcendentals=0,
        bytes_accessed=n_pad * (feat_in * 2 + 4 * 4) + weight_bytes,
    )

    deep_pipeline = steps >= 3   # only useful (and only exposed) on long grids

    def row_in_spec(cols):
        idx = lambda i: (i, 0)
        if deep_pipeline:
            try:
                return pl.BlockSpec((tile, cols), idx,
                                    pipeline_mode=pl.Buffered(3))
            except TypeError:      # older BlockSpec without pipeline_mode
                pass
        return pl.BlockSpec((tile, cols), idx)

    weight_specs = [pl.BlockSpec(a.shape, lambda i: (0, 0)) for a in prepared]

    out = pl.pallas_call(
        _nerf_kernel,
        out_shape=jax.ShapeDtypeStruct((n_pad, 4), jnp.float32),
        grid_spec=pltpu.PrefetchScalarGridSpec(
            num_scalar_prefetch=0,
            grid=(steps,),
            in_specs=[row_in_spec(feat_in)] + weight_specs,
            out_specs=pl.BlockSpec((tile, 4), lambda i: (i, 0)),
        ),
        compiler_params=pltpu.CompilerParams(
            dimension_semantics=("parallel",)),
        cost_estimate=cost,
    )(x2, *prepared)

    return out[:n].reshape(*orig_shape[:-1], 4)


# --------------------------------------------------------------------------- #
# Params / reference / test
# --------------------------------------------------------------------------- #
def init_params(key, *, dim_xyz, dim_dir, hidden):
    """Deterministic init mirroring torch.nn.Linear shapes; weights stored (in, out)."""
    def linear(k, fan_in, fan_out):
        k1, k2 = jax.random.split(k)
        bound = 1.0 / np.sqrt(fan_in)
        w = jax.random.uniform(k1, (fan_in, fan_out), jnp.float32, -bound, bound)
        b = jax.random.uniform(k2, (1, fan_out), jnp.float32, -bound, bound)
        return w, b

    keys = jax.random.split(key, 7)
    w1, b1 = linear(keys[0], dim_xyz, hidden)                 # layer1
    w2, b2 = linear(keys[1], hidden, hidden)                  # layer2
    w3, b3 = linear(keys[2], hidden, hidden)                  # layer3
    wa, ba = linear(keys[3], hidden, 1)                       # fc_alpha
    w4, b4 = linear(keys[4], hidden + dim_dir, hidden // 2)   # layer4
    w5, b5 = linear(keys[5], hidden // 2, hidden // 2)        # layer5
    wr, br = linear(keys[6], hidden // 2, 3)                  # fc_rgb
    return (w1, b1, w2, b2, w3, b3, wa, ba, w4, b4, w5, b5, wr, br)


def reference_forward(x, params, *, dim_xyz):
    """Pure-f32, PyTorch-faithful reference."""
    (w1, b1, w2, b2, w3, b3, wa, ba, w4, b4, w5, b5, wr, br) = params
    xyz, dire = x[..., :dim_xyz], x[..., dim_xyz:]
    h = jax.nn.relu(xyz @ w1 + b1[0])
    h = jax.nn.relu(h @ w2 + b2[0])
    feat = h @ w3 + b3[0]
    alpha = h @ wa + ba[0]
    y = jax.nn.relu(jnp.concatenate((feat, dire), axis=-1) @ w4 + b4[0])
    y = jax.nn.relu(y @ w5 + b5[0])
    rgb = y @ wr + br[0]
    return jnp.concatenate((rgb, alpha), axis=-1)


if __name__ == "__main__":
    # Module-default encodings; smaller hidden size for a quick test.
    num_encoding_fn_xyz, num_encoding_fn_dir = 6, 4
    dim_xyz = 3 + 2 * 3 * num_encoding_fn_xyz   # 39
    dim_dir = 3 + 2 * 3 * num_encoding_fn_dir   # 27
    hidden = 64

    key = jax.random.PRNGKey(0)
    k_params, k_x = jax.random.split(key)
    params = init_params(k_params, dim_xyz=dim_xyz, dim_dir=dim_dir, hidden=hidden)
    prepared = prepare_params(params, dim_xyz=dim_xyz, dim_dir=dim_dir)

    # Example input: 2 rays x 128 samples, features = dim_xyz + dim_dir = 66.
    x = jax.random.normal(k_x, (2, 128, dim_xyz + dim_dir), jnp.float32)

    out = replicate_nerf_forward(x, prepared, dim_xyz=dim_xyz, dim_dir=dim_dir)
    out = jax.block_until_ready(out)

    ref = reference_forward(x, params, dim_xyz=dim_xyz)
    assert out.shape == (2, 128, 4), out.shape
    # bf16 MXU inputs (f32 accumulation) + the exact-but-reassociated layer3->4
    # folding shift rounding slightly vs the pure-f32 reference.
    np.testing.assert_allclose(np.asarray(out), np.asarray(ref), rtol=5e-2, atol=5e-2)
    print("KERNEL_OK")
</pallas_src>

<mosaic_0001>
module attributes {stable_mosaic.version = 11 : i64} {
  func.func @_nerf_kernel(%arg0: i32, %arg1: memref<256x66xbf16, #tpu.memory_space<vmem>>, %arg2: memref<66x64xbf16, #tpu.memory_space<vmem>>, %arg3: memref<1x64xf32, #tpu.memory_space<vmem>>, %arg4: memref<64x64xbf16, #tpu.memory_space<vmem>>, %arg5: memref<1x64xf32, #tpu.memory_space<vmem>>, %arg6: memref<64x32xbf16, #tpu.memory_space<vmem>>, %arg7: memref<1x32xf32, #tpu.memory_space<vmem>>, %arg8: memref<66x32xbf16, #tpu.memory_space<vmem>>, %arg9: memref<1x64xf32, #tpu.memory_space<vmem>>, %arg10: memref<32x32xbf16, #tpu.memory_space<vmem>>, %arg11: memref<1x32xf32, #tpu.memory_space<vmem>>, %arg12: memref<32x4xbf16, #tpu.memory_space<vmem>>, %arg13: memref<1x4xf32, #tpu.memory_space<vmem>>, %arg14: memref<256x4xf32, #tpu.memory_space<vmem>>) attributes {dimension_semantics = [#tpu.dimension_semantics<parallel>], iteration_bounds = array<i64: 1>, scalar_prefetch = 0 : i64, scratch_operands = 0 : i64, tpu.core_type = #tpu.core_type<tc>, window_params = [{transform_indices = @transform_0, window_bounds = array<i64: 256, 66>}, {pipeline_mode = #tpu.pipeline_mode<synchronous>, transform_indices = @transform_1, window_bounds = array<i64: 66, 64>}, {pipeline_mode = #tpu.pipeline_mode<synchronous>, transform_indices = @transform_2, window_bounds = array<i64: 1, 64>}, {pipeline_mode = #tpu.pipeline_mode<synchronous>, transform_indices = @transform_3, window_bounds = array<i64: 64, 64>}, {pipeline_mode = #tpu.pipeline_mode<synchronous>, transform_indices = @transform_4, window_bounds = array<i64: 1, 64>}, {pipeline_mode = #tpu.pipeline_mode<synchronous>, transform_indices = @transform_5, window_bounds = array<i64: 64, 32>}, {pipeline_mode = #tpu.pipeline_mode<synchronous>, transform_indices = @transform_6, window_bounds = array<i64: 1, 32>}, {pipeline_mode = #tpu.pipeline_mode<synchronous>, transform_indices = @transform_7, window_bounds = array<i64: 66, 32>}, {pipeline_mode = #tpu.pipeline_mode<synchronous>, transform_indices = @transform_8, window_bounds = array<i64: 1, 64>}, {pipeline_mode = #tpu.pipeline_mode<synchronous>, transform_indices = @transform_9, window_bounds = array<i64: 32, 32>}, {pipeline_mode = #tpu.pipeline_mode<synchronous>, transform_indices = @transform_10, window_bounds = array<i64: 1, 32>}, {pipeline_mode = #tpu.pipeline_mode<synchronous>, transform_indices = @transform_11, window_bounds = array<i64: 32, 4>}, {pipeline_mode = #tpu.pipeline_mode<synchronous>, transform_indices = @transform_12, window_bounds = array<i64: 1, 4>}, {transform_indices = @transform_13, window_bounds = array<i64: 256, 4>}]} {
    %c0 = arith.constant 0 : index
    %c0_0 = arith.constant 0 : index
    %0 = vector.load %arg1[%c0, %c0_0] : memref<256x66xbf16, #tpu.memory_space<vmem>>, vector<256x66xbf16>
    %c0_1 = arith.constant 0 : index
    %c0_2 = arith.constant 0 : index
    %1 = vector.load %arg2[%c0_1, %c0_2] : memref<66x64xbf16, #tpu.memory_space<vmem>>, vector<66x64xbf16>
    %cst = arith.constant dense<0.000000e+00> : vector<256x64xf32>
    %2 = tpu.matmul %0, %1, %cst {dimension_numbers = #tpu.dot_dimension_numbers<[1], [0], [0], [1], [0, 0, 1, 1], [], []>} : vector<256x66xbf16>, vector<66x64xbf16>, vector<256x64xf32> -> vector<256x64xf32>
    %c0_3 = arith.constant 0 : index
    %c0_4 = arith.constant 0 : index
    %3 = vector.load %arg3[%c0_3, %c0_4] : memref<1x64xf32, #tpu.memory_space<vmem>>, vector<1x64xf32>
    %4 = vector.broadcast %3 : vector<1x64xf32> to vector<256x64xf32>
    %5 = arith.addf %2, %4 : vector<256x64xf32>
    %cst_5 = arith.constant 0.000000e+00 : f32
    %6 = vector.broadcast %cst_5 : f32 to vector<256x64xf32>
    %7 = arith.maximumf %5, %6 : vector<256x64xf32>
    %8 = arith.truncf %7 : vector<256x64xf32> to vector<256x64xbf16>
    %c0_6 = arith.constant 0 : index
    %c0_7 = arith.constant 0 : index
    %9 = vector.load %arg4[%c0_6, %c0_7] : memref<64x64xbf16, #tpu.memory_space<vmem>>, vector<64x64xbf16>
    %cst_8 = arith.constant dense<0.000000e+00> : vector<256x64xf32>
    %10 = tpu.matmul %8, %9, %cst_8 {dimension_numbers = #tpu.dot_dimension_numbers<[1], [0], [0], [1], [0, 0, 1, 1], [], []>} : vector<256x64xbf16>, vector<64x64xbf16>, vector<256x64xf32> -> vector<256x64xf32>
    %c0_9 = arith.constant 0 : index
    %c0_10 = arith.constant 0 : index
    %11 = vector.load %arg5[%c0_9, %c0_10] : memref<1x64xf32, #tpu.memory_space<vmem>>, vector<1x64xf32>
    %12 = vector.broadcast %11 : vector<1x64xf32> to vector<256x64xf32>
    %13 = arith.addf %10, %12 : vector<256x64xf32>
    %cst_11 = arith.constant 0.000000e+00 : f32
    %14 = vector.broadcast %cst_11 : f32 to vector<256x64xf32>
    %15 = arith.maximumf %13, %14 : vector<256x64xf32>
    %c0_12 = arith.constant 0 : index
    %c0_13 = arith.constant 0 : index
    %16 = vector.load %arg9[%c0_12, %c0_13] : memref<1x64xf32, #tpu.memory_space<vmem>>, vector<1x64xf32>
    %17 = vector.broadcast %16 : vector<1x64xf32> to vector<256x64xf32>
    %18 = arith.mulf %15, %17 : vector<256x64xf32>
    %cst_14 = arith.constant dense<0.000000e+00> : vector<256xf32>
    %19 = vector.multi_reduction <add>, %18, %cst_14 [1] : vector<256x64xf32> to vector<256xf32>
    %20 = vector.shape_cast %19 : vector<256xf32> to vector<256x1xf32>
    %21 = arith.truncf %15 : vector<256x64xf32> to vector<256x64xbf16>
    %c0_15 = arith.constant 0 : index
    %c0_16 = arith.constant 0 : index
    %22 = vector.load %arg6[%c0_15, %c0_16] : memref<64x32xbf16, #tpu.memory_space<vmem>>, vector<64x32xbf16>
    %cst_17 = arith.constant dense<0.000000e+00> : vector<256x32xf32>
    %23 = tpu.matmul %21, %22, %cst_17 {dimension_numbers = #tpu.dot_dimension_numbers<[1], [0], [0], [1], [0, 0, 1, 1], [], []>} : vector<256x64xbf16>, vector<64x32xbf16>, vector<256x32xf32> -> vector<256x32xf32>
    %c0_18 = arith.constant 0 : index
    %c0_19 = arith.constant 0 : index
    %24 = vector.load %arg8[%c0_18, %c0_19] : memref<66x32xbf16, #tpu.memory_space<vmem>>, vector<66x32xbf16>
    %cst_20 = arith.constant dense<0.000000e+00> : vector<256x32xf32>
    %25 = tpu.matmul %0, %24, %cst_20 {dimension_numbers = #tpu.dot_dimension_numbers<[1], [0], [0], [1], [0, 0, 1, 1], [], []>} : vector<256x66xbf16>, vector<66x32xbf16>, vector<256x32xf32> -> vector<256x32xf32>
    %26 = arith.addf %23, %25 : vector<256x32xf32>
    %c0_21 = arith.constant 0 : index
    %c0_22 = arith.constant 0 : index
    %27 = vector.load %arg7[%c0_21, %c0_22] : memref<1x32xf32, #tpu.memory_space<vmem>>, vector<1x32xf32>
    %28 = vector.broadcast %27 : vector<1x32xf32> to vector<256x32xf32>
    %29 = arith.addf %26, %28 : vector<256x32xf32>
    %cst_23 = arith.constant 0.000000e+00 : f32
    %30 = vector.broadcast %cst_23 : f32 to vector<256x32xf32>
    %31 = arith.maximumf %29, %30 : vector<256x32xf32>
    %32 = arith.truncf %31 : vector<256x32xf32> to vector<256x32xbf16>
    %c0_24 = arith.constant 0 : index
    %c0_25 = arith.constant 0 : index
    %33 = vector.load %arg10[%c0_24, %c0_25] : memref<32x32xbf16, #tpu.memory_space<vmem>>, vector<32x32xbf16>
    %cst_26 = arith.constant dense<0.000000e+00> : vector<256x32xf32>
    %34 = tpu.matmul %32, %33, %cst_26 {dimension_numbers = #tpu.dot_dimension_numbers<[1], [0], [0], [1], [0, 0, 1, 1], [], []>} : vector<256x32xbf16>, vector<32x32xbf16>, vector<256x32xf32> -> vector<256x32xf32>
    %c0_27 = arith.constant 0 : index
    %c0_28 = arith.constant 0 : index
    %35 = vector.load %arg11[%c0_27, %c0_28] : memref<1x32xf32, #tpu.memory_space<vmem>>, vector<1x32xf32>
    %36 = vector.broadcast %35 : vector<1x32xf32> to vector<256x32xf32>
    %37 = arith.addf %34, %36 : vector<256x32xf32>
    %cst_29 = arith.constant 0.000000e+00 : f32
    %38 = vector.broadcast %cst_29 : f32 to vector<256x32xf32>
    %39 = arith.maximumf %37, %38 : vector<256x32xf32>
    %40 = arith.truncf %39 : vector<256x32xf32> to vector<256x32xbf16>
    %c0_30 = arith.constant 0 : index
    %c0_31 = arith.constant 0 : index
    %41 = vector.load %arg12[%c0_30, %c0_31] : memref<32x4xbf16, #tpu.memory_space<vmem>>, vector<32x4xbf16>
    %cst_32 = arith.constant dense<0.000000e+00> : vector<256x4xf32>
    %42 = tpu.matmul %40, %41, %cst_32 {dimension_numbers = #tpu.dot_dimension_numbers<[1], [0], [0], [1], [0, 0, 1, 1], [], []>} : vector<256x32xbf16>, vector<32x4xbf16>, vector<256x4xf32> -> vector<256x4xf32>
    %c0_33 = arith.constant 0 : index
    %c0_34 = arith.constant 0 : index
    %43 = vector.load %arg13[%c0_33, %c0_34] : memref<1x4xf32, #tpu.memory_space<vmem>>, vector<1x4xf32>
    %44 = vector.broadcast %43 : vector<1x4xf32> to vector<256x4xf32>
    %45 = arith.addf %42, %44 : vector<256x4xf32>
    %46 = tpu.iota {dimensions = array<i32: 1>} : vector<1x4xi32>
    %c3_i32 = arith.constant 3 : i32
    %47 = vector.broadcast %c3_i32 : i32 to vector<1x4xi32>
    %48 = arith.cmpi eq, %46, %47 : vector<1x4xi32>
    %49 = arith.extui %48 : vector<1x4xi1> to vector<1x4xi32>
    %50 = arith.sitofp %49 : vector<1x4xi32> to vector<1x4xf32>
    %51 = vector.broadcast %20 : vector<256x1xf32> to vector<256x4xf32>
    %52 = vector.broadcast %50 : vector<1x4xf32> to vector<256x4xf32>
    %53 = arith.mulf %51, %52 : vector<256x4xf32>
    %54 = arith.addf %45, %53 : vector<256x4xf32>
    %c0_35 = arith.constant 0 : index
    %c0_36 = arith.constant 0 : index
    %55 = vector.load %arg14[%c0_35, %c0_36] : memref<256x4xf32, #tpu.memory_space<vmem>>, vector<256x4xf32>
    tpu.vector_store %arg14[%c0_35, %c0_36], %54 {strides = array<i32>} : memref<256x4xf32, #tpu.memory_space<vmem>>, vector<256x4xf32>,
    return
  }
  func.func @transform_0(%arg0: i32) -> (i32, i32) {
    %c0_i32 = arith.constant 0 : i32
    %c0_i32_0 = arith.constant 0 : i32
    return %arg0, %c0_i32 : i32, i32
  }
  func.func @transform_1(%arg0: i32) -> (i32, i32) {
    %c0_i32 = arith.constant 0 : i32
    %c0_i32_0 = arith.constant 0 : i32
    %c0_i32_1 = arith.constant 0 : i32
    return %c0_i32, %c0_i32_0 : i32, i32
  }
  func.func @transform_2(%arg0: i32) -> (i32, i32) {
    %c0_i32 = arith.constant 0 : i32
    %c0_i32_0 = arith.constant 0 : i32
    %c0_i32_1 = arith.constant 0 : i32
    return %c0_i32, %c0_i32_0 : i32, i32
  }
  func.func @transform_3(%arg0: i32) -> (i32, i32) {
    %c0_i32 = arith.constant 0 : i32
    %c0_i32_0 = arith.constant 0 : i32
    %c0_i32_1 = arith.constant 0 : i32
    return %c0_i32, %c0_i32_0 : i32, i32
  }
  func.func @transform_4(%arg0: i32) -> (i32, i32) {
    %c0_i32 = arith.constant 0 : i32
    %c0_i32_0 = arith.constant 0 : i32
    %c0_i32_1 = arith.constant 0 : i32
    return %c0_i32, %c0_i32_0 : i32, i32
  }
  func.func @transform_5(%arg0: i32) -> (i32, i32) {
    %c0_i32 = arith.constant 0 : i32
    %c0_i32_0 = arith.constant 0 : i32
    %c0_i32_1 = arith.constant 0 : i32
    return %c0_i32, %c0_i32_0 : i32, i32
  }
  func.func @transform_6(%arg0: i32) -> (i32, i32) {
    %c0_i32 = arith.constant 0 : i32
    %c0_i32_0 = arith.constant 0 : i32
    %c0_i32_1 = arith.constant 0 : i32
    return %c0_i32, %c0_i32_0 : i32, i32
  }
  func.func @transform_7(%arg0: i32) -> (i32, i32) {
    %c0_i32 = arith.constant 0 : i32
    %c0_i32_0 = arith.constant 0 : i32
    %c0_i32_1 = arith.constant 0 : i32
    return %c0_i32, %c0_i32_0 : i32, i32
  }
  func.func @transform_8(%arg0: i32) -> (i32, i32) {
    %c0_i32 = arith.constant 0 : i32
    %c0_i32_0 = arith.constant 0 : i32
    %c0_i32_1 = arith.constant 0 : i32
    return %c0_i32, %c0_i32_0 : i32, i32
  }
  func.func @transform_9(%arg0: i32) -> (i32, i32) {
    %c0_i32 = arith.constant 0 : i32
    %c0_i32_0 = arith.constant 0 : i32
    %c0_i32_1 = arith.constant 0 : i32
    return %c0_i32, %c0_i32_0 : i32, i32
  }
  func.func @transform_10(%arg0: i32) -> (i32, i32) {
    %c0_i32 = arith.constant 0 : i32
    %c0_i32_0 = arith.constant 0 : i32
    %c0_i32_1 = arith.constant 0 : i32
    return %c0_i32, %c0_i32_0 : i32, i32
  }
  func.func @transform_11(%arg0: i32) -> (i32, i32) {
    %c0_i32 = arith.constant 0 : i32
    %c0_i32_0 = arith.constant 0 : i32
    %c0_i32_1 = arith.constant 0 : i32
    return %c0_i32, %c0_i32_0 : i32, i32
  }
  func.func @transform_12(%arg0: i32) -> (i32, i32) {
    %c0_i32 = arith.constant 0 : i32
    %c0_i32_0 = arith.constant 0 : i32
    %c0_i32_1 = arith.constant 0 : i32
    return %c0_i32, %c0_i32_0 : i32, i32
  }
  func.func @transform_13(%arg0: i32) -> (i32, i32) {
    %c0_i32 = arith.constant 0 : i32
    %c0_i32_0 = arith.constant 0 : i32
    return %arg0, %c0_i32 : i32, i32
  }
}

</mosaic_0001>

<llo_original>
// kernel: tpu_custom_call.1
$region0: #{tpu_custom_call.1}
  #allocation0 [shape = 'u32[]', space=smem, size = 0x4, offset = 0x4, fixed_abs, tag = 'smem constant byte address 0x4 - core index']
  #allocation1 [shape = 'u32[144,128]{1,0:T(1,128)}', space=vmem, size = 0x12000, scoped, tag = 'internal scratch']
  %s0 = inlined_call_operand.vmem [shape: bf16[256,66], index: 0, kind: input, shape index: {}]
  %s1 = inlined_call_operand.vmem [shape: bf16[66,64], index: 1, kind: input, shape index: {}]
  %s2 = inlined_call_operand.vmem [shape: f32[1,64], index: 2, kind: input, shape index: {}]
  %s3 = inlined_call_operand.vmem [shape: bf16[64,64], index: 3, kind: input, shape index: {}]
  %s4 = inlined_call_operand.vmem [shape: f32[1,64], index: 4, kind: input, shape index: {}]
  %s5 = inlined_call_operand.vmem [shape: bf16[64,32], index: 5, kind: input, shape index: {}]
  %s6 = inlined_call_operand.vmem [shape: f32[1,32], index: 6, kind: input, shape index: {}]
  %s7 = inlined_call_operand.vmem [shape: bf16[66,32], index: 7, kind: input, shape index: {}]
  %s8 = inlined_call_operand.vmem [shape: f32[1,64], index: 8, kind: input, shape index: {}]
  %s9 = inlined_call_operand.vmem [shape: bf16[32,32], index: 9, kind: input, shape index: {}]
  %s10 = inlined_call_operand.vmem [shape: f32[1,32], index: 10, kind: input, shape index: {}]
  %s11 = inlined_call_operand.vmem [shape: bf16[32,4], index: 11, kind: input, shape index: {}]
  %s12 = inlined_call_operand.vmem [shape: f32[1,4], index: 12, kind: input, shape index: {}]
  %s13 = inlined_call_operand.vmem [shape: f32[256,4], index: 13, kind: output, shape index: {}]
  %s14 = sld [smem:[#allocation0]]
  $region62: #{tpu_custom_call.1} parent=0
    _
  %s16 = ssub.s32 1, %s14
  %s17 = scalar_select 0, %s16, %s14
  // Predicated region
  $region2: #{tpu_custom_call.1} parent=0 // pred_check
    _
  $region3: #{tpu_custom_call.1} parent=0 // pred_check_branch
    %19 = sbr.rel (0) target = $region5
  $region4: #{tpu_custom_call.1} parent=0 // pred_region
    _
  $region5: #{tpu_custom_call.1} parent=0 // pred_fallthru
    _
  // Predicated region
  $region6: #{tpu_custom_call.1} parent=0 // pred_check
    _
  $region7: #{tpu_custom_call.1} parent=0 // pred_check_branch
    %21 = sbr.rel (0) target = $region9
  $region8: #{tpu_custom_call.1} parent=0 // pred_region
    _
  $region9: #{tpu_custom_call.1} parent=0 // pred_fallthru
    _
  // Predicated region
  $region10: #{tpu_custom_call.1} parent=0 // pred_check
    _
  $region11: #{tpu_custom_call.1} parent=0 // pred_check_branch
    %23 = sbr.rel (0) target = $region13
  $region12: #{tpu_custom_call.1} parent=0 // pred_region
    _
  $region13: #{tpu_custom_call.1} parent=0 // pred_fallthru
    _
  // Predicated region
  $region14: #{tpu_custom_call.1} parent=0 // pred_check
    _
  $region15: #{tpu_custom_call.1} parent=0 // pred_check_branch
    %25 = sbr.rel (0) target = $region17
  $region16: #{tpu_custom_call.1} parent=0 // pred_region
    _
  $region17: #{tpu_custom_call.1} parent=0 // pred_fallthru
    _
  // Predicated region
  $region18: #{tpu_custom_call.1} parent=0 // pred_check
    _
  $region19: #{tpu_custom_call.1} parent=0 // pred_check_branch
    %27 = sbr.rel (0) target = $region21
  $region20: #{tpu_custom_call.1} parent=0 // pred_region
    _
  $region21: #{tpu_custom_call.1} parent=0 // pred_fallthru
    _
  // Predicated region
  $region22: #{tpu_custom_call.1} parent=0 // pred_check
    _
  $region23: #{tpu_custom_call.1} parent=0 // pred_check_branch
    %29 = sbr.rel (0) target = $region25
  $region24: #{tpu_custom_call.1} parent=0 // pred_region
    _
  $region25: #{tpu_custom_call.1} parent=0 // pred_fallthru
    _
  // Predicated region
  $region26: #{tpu_custom_call.1} parent=0 // pred_check
    _
  $region27: #{tpu_custom_call.1} parent=0 // pred_check_branch
    %31 = sbr.rel (0) target = $region29
  $region28: #{tpu_custom_call.1} parent=0 // pred_region
    _
  $region29: #{tpu_custom_call.1} parent=0 // pred_fallthru
    _
  // Predicated region
  $region30: #{tpu_custom_call.1} parent=0 // pred_check
    _
  $region31: #{tpu_custom_call.1} parent=0 // pred_check_branch
    %33 = sbr.rel (0) target = $region33
  $region32: #{tpu_custom_call.1} parent=0 // pred_region
    _
  $region33: #{tpu_custom_call.1} parent=0 // pred_fallthru
    _
  // Predicated region
  $region34: #{tpu_custom_call.1} parent=0 // pred_check
    _
  $region35: #{tpu_custom_call.1} parent=0 // pred_check_branch
    %35 = sbr.rel (0) target = $region37
  $region36: #{tpu_custom_call.1} parent=0 // pred_region
    _
  $region37: #{tpu_custom_call.1} parent=0 // pred_fallthru
    _
  // Predicated region
  $region38: #{tpu_custom_call.1} parent=0 // pred_check
    _
  $region39: #{tpu_custom_call.1} parent=0 // pred_check_branch
    %37 = sbr.rel (0) target = $region41
  $region40: #{tpu_custom_call.1} parent=0 // pred_region
    _
  $region41: #{tpu_custom_call.1} parent=0 // pred_fallthru
    _
  // Predicated region
  $region42: #{tpu_custom_call.1} parent=0 // pred_check
    _
  $region43: #{tpu_custom_call.1} parent=0 // pred_check_branch
    %39 = sbr.rel (0) target = $region45
  $region44: #{tpu_custom_call.1} parent=0 // pred_region
    _
  $region45: #{tpu_custom_call.1} parent=0 // pred_fallthru
    _
  // Predicated region
  $region46: #{tpu_custom_call.1} parent=0 // pred_check
    _
  $region47: #{tpu_custom_call.1} parent=0 // pred_check_branch
    %41 = sbr.rel (0) target = $region49
  $region48: #{tpu_custom_call.1} parent=0 // pred_region
    _
  $region49: #{tpu_custom_call.1} parent=0 // pred_fallthru
    _
  // Predicated region
  $region50: #{tpu_custom_call.1} parent=0 // pred_check
    _
  $region51: #{tpu_custom_call.1} parent=0 // pred_check_branch
    %43 = sbr.rel (0) target = $region53
  $region52: #{tpu_custom_call.1} parent=0 // pred_region
    _
  $region53: #{tpu_custom_call.1} parent=0 // pred_fallthru
    _
  %v45 = vld [vmem:[%s0] sm:$0xf]
  %v46 = vld [vmem:[%s0 + $0x4] sm:$0xf]
  %v47 = vld [vmem:[%s0 + $0x8] sm:$0xf]
  %v48 = vld [vmem:[%s0 + $0xc] sm:$0xf]
  %v49 = vld [vmem:[%s0 + $0x10] sm:$0xf]
  %v50 = vld [vmem:[%s0 + $0x14] sm:$0xf]
  %v51 = vld [vmem:[%s0 + $0x18] sm:$0xf]
  %v52 = vld [vmem:[%s0 + $0x1c] sm:$0xf]
  %v53 = vld [vmem:[%s0 + $0x20] sm:$0xf]
  %v54 = vld [vmem:[%s0 + $0x24] sm:$0xf]
  %v55 = vld [vmem:[%s0 + $0x28] sm:$0xf]
  %v56 = vld [vmem:[%s0 + $0x2c] sm:$0xf]
  %v57 = vld [vmem:[%s0 + $0x30] sm:$0xf]
  %v58 = vld [vmem:[%s0 + $0x34] sm:$0xf]
  %v59 = vld [vmem:[%s0 + $0x38] sm:$0xf]
  %v60 = vld [vmem:[%s0 + $0x3c] sm:$0xf]
  %v61 = vld [vmem:[%s0 + $0x40] sm:$0xf]
  %v62 = vld [vmem:[%s0 + $0x44] sm:$0xf]
  %v63 = vld [vmem:[%s0 + $0x48] sm:$0xf]
  %v64 = vld [vmem:[%s0 + $0x4c] sm:$0xf]
  %v65 = vld [vmem:[%s0 + $0x50] sm:$0xf]
  %v66 = vld [vmem:[%s0 + $0x54] sm:$0xf]
  %v67 = vld [vmem:[%s0 + $0x58] sm:$0xf]
  %v68 = vld [vmem:[%s0 + $0x5c] sm:$0xf]
  %v69 = vld [vmem:[%s0 + $0x60] sm:$0xf]
  %v70 = vld [vmem:[%s0 + $0x64] sm:$0xf]
  %v71 = vld [vmem:[%s0 + $0x68] sm:$0xf]
  %v72 = vld [vmem:[%s0 + $0x6c] sm:$0xf]
  %v73 = vld [vmem:[%s0 + $0x70] sm:$0xf]
  %v74 = vld [vmem:[%s0 + $0x74] sm:$0xf]
  %v75 = vld [vmem:[%s0 + $0x78] sm:$0xf]
  %v76 = vld [vmem:[%s0 + $0x7c] sm:$0xf]
  %v77 = vld [vmem:[%s1] sm:$0xf]
  %v78 = vld [vmem:[%s1 + $0x4] sm:$0xf]
  %v79 = vld [vmem:[%s1 + $0x8] sm:$0xf]
  %v80 = vld [vmem:[%s1 + $0xc] sm:$0xf]
  %v81 = vld [vmem:[%s1 + $0x10] sm:$0xf]
  %v82 = vld [vmem:[%s1 + $0x14] sm:$0xf]
  %v83 = vld [vmem:[%s1 + $0x18] sm:$0xf]
  %v84 = vld [vmem:[%s1 + $0x1c] sm:$0xf]
  %v85 = vld [vmem:[%s1 + $0x20] sm:$0x1]
  %v86 = vld [vmem:[%s2] sm:$0x1]
  %v88 = vlaneseq
  %v89 = vshrl.u32 %v88, 7
  %v90 = vsub.s32 0, %v89
  %v91 = vrot.slane %v86, %v90
  %v125 = vunpack.c.l.b16 %v45
  %v126 = vunpack.c.l.b16 %v46
  %v127 = vunpack.c.l.b16 %v47
  %v128 = vunpack.c.l.b16 %v48
  %v129 = vunpack.c.l.b16 %v49
  %v130 = vunpack.c.l.b16 %v50
  %v131 = vunpack.c.l.b16 %v51
  %v132 = vunpack.c.l.b16 %v52
  %v133 = vunpack.c.l.b16 %v53
  %v134 = vunpack.c.l.b16 %v54
  %v135 = vunpack.c.l.b16 %v55
  %v136 = vunpack.c.l.b16 %v56
  %v137 = vunpack.c.l.b16 %v57
  %v138 = vunpack.c.l.b16 %v58
  %v139 = vunpack.c.l.b16 %v59
  %v140 = vunpack.c.l.b16 %v60
  %v141 = vunpack.c.l.b16 %v61
  %v142 = vunpack.c.l.b16 %v62
  %v143 = vunpack.c.l.b16 %v63
  %v144 = vunpack.c.l.b16 %v64
  %v145 = vunpack.c.l.b16 %v65
  %v146 = vunpack.c.l.b16 %v66
  %v147 = vunpack.c.l.b16 %v67
  %v148 = vunpack.c.l.b16 %v68
  %v149 = vunpack.c.l.b16 %v69
  %v150 = vunpack.c.l.b16 %v70
  %v151 = vunpack.c.l.b16 %v71
  %v152 = vunpack.c.l.b16 %v72
  %v153 = vunpack.c.l.b16 %v73
  %v154 = vunpack.c.l.b16 %v74
  %v155 = vunpack.c.l.b16 %v75
  %v156 = vunpack.c.l.b16 %v76
  %v157 = vpack.c.b16 %v126, %v125
  %v158 = vpack.c.b16 %v128, %v127
  %v159 = vpack.c.b16 %v130, %v129
  %v160 = vpack.c.b16 %v132, %v131
  %v161 = vpack.c.b16 %v134, %v133
  %v162 = vpack.c.b16 %v136, %v135
  %v163 = vpack.c.b16 %v138, %v137
  %v164 = vpack.c.b16 %v140, %v139
  %v165 = vpack.c.b16 %v142, %v141
  %v166 = vpack.c.b16 %v144, %v143
  %v167 = vpack.c.b16 %v146, %v145
  %v168 = vpack.c.b16 %v148, %v147
  %v169 = vpack.c.b16 %v150, %v149
  %v170 = vpack.c.b16 %v152, %v151
  %v171 = vpack.c.b16 %v154, %v153
  %v172 = vpack.c.b16 %v156, %v155
  %v182 = vunpack.c.l.b16 %v77
  %v183 = vunpack.c.l.b16 %v78
  %v184 = vunpack.c.l.b16 %v79
  %v185 = vunpack.c.l.b16 %v80
  %v186 = vunpack.c.l.b16 %v81
  %v187 = vunpack.c.l.b16 %v82
  %v188 = vunpack.c.l.b16 %v83
  %v189 = vunpack.c.l.b16 %v84
  %v190 = vunpack.c.l.b16 %v85
  %v191 = vpack.c.b16 %v183, %v182
  %v192 = vpack.c.b16 %v185, %v184
  %v193 = vpack.c.b16 %v187, %v186
  %v194 = vpack.c.b16 %v189, %v188
  %v195 = vpack.c.b16 %v190, %v190
  %vm200 = vcmask 539648
  %v202 = vsel %vm200, %v157, 0
  %v205 = vsel %vm200, %v158, 0
  %v208 = vsel %vm200, %v159, 0
  %v211 = vsel %vm200, %v160, 0
  %v214 = vsel %vm200, %v161, 0
  %v217 = vsel %vm200, %v162, 0
  %v220 = vsel %vm200, %v163, 0
  %v223 = vsel %vm200, %v164, 0
  %v226 = vsel %vm200, %v165, 0
  %v229 = vsel %vm200, %v166, 0
  %v232 = vsel %vm200, %v167, 0
  %v235 = vsel %vm200, %v168, 0
  %v238 = vsel %vm200, %v169, 0
  %v241 = vsel %vm200, %v170, 0
  %v244 = vsel %vm200, %v171, 0
  %v247 = vsel %vm200, %v172, 0
  %vm249 = vcmask 1040384
  %v251 = vsel %vm249, %v195, 0
  %253 = vmatprep.subr.bf16.mxu0 0
  %254 = vmatpush1.bf16.msra.mxu0 %v191
  %255 = vmatprep.subr.bf16.mxu0 0
  %256 = vmatpush1.bf16.msra.mxu0 %v192
  %257 = vmatprep.subr.bf16.mxu0 0
  %258 = vmatpush1.bf16.msra.mxu0 %v193
  %259 = vmatprep.subr.bf16.mxu0 0
  %260 = vmatpush1.bf16.msra.mxu0 %v194
  %261 = vmatprep.subr.bf16.mxu0 0
  %262 = vmatpush1.bf16.msra.mxu0 %v251
  %263 = vmatprep.subr.bf16.mxu0 0
  %264 = vmatpush1.bf16.msra.mxu0 0
  %265 = vmatprep.subr.bf16.mxu0 0
  %266 = vmatpush1.bf16.msra.mxu0 0
  %267 = vmatprep.subr.bf16.mxu0 0
  %268 = vmatpush1.bf16.msra.mxu0 0
  %269 = vmatprep.subr.bf16.mxu0 0
  %270 = vmatpush1.bf16.msra.mxu0 0
  %271 = vmatprep.subr.bf16.mxu0 0
  %272 = vmatpush1.bf16.msra.mxu0 0
  %273 = vmatprep.subr.bf16.mxu0 0
  %274 = vmatpush1.bf16.msra.mxu0 0
  %275 = vmatprep.subr.bf16.mxu0 0
  %276 = vmatpush1.bf16.msra.mxu0 0
  %277 = vmatprep.subr.bf16.mxu0 0
  %278 = vmatpush1.bf16.msra.mxu0 0
  %279 = vmatprep.subr.bf16.mxu0 0
  %280 = vmatpush1.bf16.msra.mxu0 0
  %281 = vmatprep.subr.bf16.mxu0 0
  %282 = vmatpush1.bf16.msra.mxu0 0
  %283 = vmatprep.subr.bf16.mxu0 0
  %284 = vmatpush1.bf16.msra.mxu0 0
  %285 = vmatprep.mubr.bf16.mxu0 0
  %286 = vmatmul.mubr.bf16.gmra.mrb[0].mxu0 %v202
  %v287 = vpop.f32.mrb[0].mxu0
  %v288 = vadd.f32 %v91, %v287
  %v289 = vpop.f32.mrb[0].mxu0
  %v290 = vpop.f32.mrb[0].mxu0
  %v291 = vadd.f32 %v91, %v290
  %v292 = vpop.f32.mrb[0].mxu0
  %293 = vmatprep.mubr.bf16.mxu0 0
  %294 = vmatmul.mubr.bf16.gmra.mrb[0].mxu0 %v205
  %v295 = vpop.f32.mrb[0].mxu0
  %v296 = vadd.f32 %v91, %v295
  %v297 = vpop.f32.mrb[0].mxu0
  %v298 = vpop.f32.mrb[0].mxu0
  %v299 = vadd.f32 %v91, %v298
  %v300 = vpop.f32.mrb[0].mxu0
  %301 = vmatprep.mubr.bf16.mxu0 0
  %302 = vmatmul.mubr.bf16.gmra.mrb[0].mxu0 %v208
  %v303 = vpop.f32.mrb[0].mxu0
  %v304 = vadd.f32 %v91, %v303
  %v305 = vpop.f32.mrb[0].mxu0
  %v306 = vpop.f32.mrb[0].mxu0
  %v307 = vadd.f32 %v91, %v306
  %v308 = vpop.f32.mrb[0].mxu0
  %309 = vmatprep.mubr.bf16.mxu0 0
  %310 = vmatmul.mubr.bf16.gmra.mrb[0].mxu0 %v211
  %v311 = vpop.f32.mrb[0].mxu0
  %v312 = vadd.f32 %v91, %v311
  %v313 = vpop.f32.mrb[0].mxu0
  %v314 = vpop.f32.mrb[0].mxu0
  %v315 = vadd.f32 %v91, %v314
  %v316 = vpop.f32.mrb[0].mxu0
  %317 = vmatprep.mubr.bf16.mxu0 0
  %318 = vmatmul.mubr.bf16.gmra.mrb[0].mxu0 %v214
  %v319 = vpop.f32.mrb[0].mxu0
  %v320 = vadd.f32 %v91, %v319
  %v321 = vpop.f32.mrb[0].mxu0
  %v322 = vpop.f32.mrb[0].mxu0
  %v323 = vadd.f32 %v91, %v322
  %v324 = vpop.f32.mrb[0].mxu0
  %325 = vmatprep.mubr.bf16.mxu0 0
  %326 = vmatmul.mubr.bf16.gmra.mrb[0].mxu0 %v217
  %v327 = vpop.f32.mrb[0].mxu0
  %v328 = vadd.f32 %v91, %v327
  %v329 = vpop.f32.mrb[0].mxu0
  %v330 = vpop.f32.mrb[0].mxu0
  %v331 = vadd.f32 %v91, %v330
  %v332 = vpop.f32.mrb[0].mxu0
  %333 = vmatprep.mubr.bf16.mxu0 0
  %334 = vmatmul.mubr.bf16.gmra.mrb[0].mxu0 %v220
  %v335 = vpop.f32.mrb[0].mxu0
  %v336 = vadd.f32 %v91, %v335
  %v337 = vpop.f32.mrb[0].mxu0
  %v338 = vpop.f32.mrb[0].mxu0
  %v339 = vadd.f32 %v91, %v338
  %v340 = vpop.f32.mrb[0].mxu0
  %341 = vmatprep.mubr.bf16.mxu0 0
  %342 = vmatmul.mubr.bf16.gmra.mrb[0].mxu0 %v223
  %v343 = vpop.f32.mrb[0].mxu0
  %v344 = vadd.f32 %v91, %v343
  %v345 = vpop.f32.mrb[0].mxu0
  %v346 = vpop.f32.mrb[0].mxu0
  %v347 = vadd.f32 %v91, %v346
  %v348 = vpop.f32.mrb[0].mxu0
  %349 = vmatprep.mubr.bf16.mxu0 0
  %350 = vmatmul.mubr.bf16.gmra.mrb[0].mxu0 %v226
  %v351 = vpop.f32.mrb[0].mxu0
  %v352 = vadd.f32 %v91, %v351
  %v353 = vpop.f32.mrb[0].mxu0
  %v354 = vpop.f32.mrb[0].mxu0
  %v355 = vadd.f32 %v91, %v354
  %v356 = vpop.f32.mrb[0].mxu0
  %357 = vmatprep.mubr.bf16.mxu0 0
  %358 = vmatmul.mubr.bf16.gmra.mrb[0].mxu0 %v229
  %v359 = vpop.f32.mrb[0].mxu0
  %v360 = vadd.f32 %v91, %v359
  %v361 = vpop.f32.mrb[0].mxu0
  %v362 = vpop.f32.mrb[0].mxu0
  %v363 = vadd.f32 %v91, %v362
  %v364 = vpop.f32.mrb[0].mxu0
  %365 = vmatprep.mubr.bf16.mxu0 0
  %366 = vmatmul.mubr.bf16.gmra.mrb[0].mxu0 %v232
  %v367 = vpop.f32.mrb[0].mxu0
  %v368 = vadd.f32 %v91, %v367
  %v369 = vpop.f32.mrb[0].mxu0
  %v370 = vpop.f32.mrb[0].mxu0
  %v371 = vadd.f32 %v91, %v370
  %v372 = vpop.f32.mrb[0].mxu0
  %373 = vmatprep.mubr.bf16.mxu0 0
  %374 = vmatmul.mubr.bf16.gmra.mrb[0].mxu0 %v235
  %v375 = vpop.f32.mrb[0].mxu0
  %v376 = vadd.f32 %v91, %v375
  %v377 = vpop.f32.mrb[0].mxu0
  %v378 = vpop.f32.mrb[0].mxu0
  %v379 = vadd.f32 %v91, %v378
  %v380 = vpop.f32.mrb[0].mxu0
  %381 = vmatprep.mubr.bf16.mxu0 0
  %382 = vmatmul.mubr.bf16.gmra.mrb[0].mxu0 %v238
  %v383 = vpop.f32.mrb[0].mxu0
  %v384 = vadd.f32 %v91, %v383
  %v385 = vpop.f32.mrb[0].mxu0
  %v386 = vpop.f32.mrb[0].mxu0
  %v387 = vadd.f32 %v91, %v386
  %v388 = vpop.f32.mrb[0].mxu0
  %389 = vmatprep.mubr.bf16.mxu0 0
  %390 = vmatmul.mubr.bf16.gmra.mrb[0].mxu0 %v241
  %v391 = vpop.f32.mrb[0].mxu0
  %v392 = vadd.f32 %v91, %v391
  %v393 = vpop.f32.mrb[0].mxu0
  %v394 = vpop.f32.mrb[0].mxu0
  %v395 = vadd.f32 %v91, %v394
  %v396 = vpop.f32.mrb[0].mxu0
  %397 = vmatprep.mubr.bf16.mxu0 0
  %398 = vmatmul.mubr.bf16.gmra.mrb[0].mxu0 %v244
  %v399 = vpop.f32.mrb[0].mxu0
  %v400 = vadd.f32 %v91, %v399
  %v401 = vpop.f32.mrb[0].mxu0
  %v402 = vpop.f32.mrb[0].mxu0
  %v403 = vadd.f32 %v91, %v402
  %v404 = vpop.f32.mrb[0].mxu0
  %405 = vmatprep.mubr.bf16.mxu0 0
  %406 = vmatmul.mubr.bf16.gmra.mrb[0].mxu0 %v247
  %v407 = vpop.f32.mrb[0].mxu0
  %v408 = vadd.f32 %v91, %v407
  %v409 = vpop.f32.mrb[0].mxu0
  %v410 = vpop.f32.mrb[0].mxu0
  %v411 = vadd.f32 %v91, %v410
  %v412 = vpop.f32.mrb[0].mxu0
  %413 = vdwg.mxu0
  %v414 = vmax.f32 %v288, 0.0
  %v415 = vmax.f32 %v291, 0.0
  %v416 = vmax.f32 %v296, 0.0
  %v417 = vmax.f32 %v299, 0.0
  %v418 = vmax.f32 %v304, 0.0
  %v419 = vmax.f32 %v307, 0.0
  %v420 = vmax.f32 %v312, 0.0
  %v421 = vmax.f32 %v315, 0.0
  %v422 = vmax.f32 %v320, 0.0
  %v423 = vmax.f32 %v323, 0.0
  %v424 = vmax.f32 %v328, 0.0
  %v425 = vmax.f32 %v331, 0.0
  %v426 = vmax.f32 %v336, 0.0
  %v427 = vmax.f32 %v339, 0.0
  %v428 = vmax.f32 %v344, 0.0
  %v429 = vmax.f32 %v347, 0.0
  %v430 = vmax.f32 %v352, 0.0
  %v431 = vmax.f32 %v355, 0.0
  %v432 = vmax.f32 %v360, 0.0
  %v433 = vmax.f32 %v363, 0.0
  %v434 = vmax.f32 %v368, 0.0
  %v435 = vmax.f32 %v371, 0.0
  %v436 = vmax.f32 %v376, 0.0
  %v437 = vmax.f32 %v379, 0.0
  %v438 = vmax.f32 %v384, 0.0
  %v439 = vmax.f32 %v387, 0.0
  %v440 = vmax.f32 %v392, 0.0
  %v441 = vmax.f32 %v395, 0.0
  %v442 = vmax.f32 %v400, 0.0
  %v443 = vmax.f32 %v403, 0.0
  %v444 = vmax.f32 %v408, 0.0
  %v445 = vmax.f32 %v411, 0.0
  %v446 = vpack.c.bf16 %v415, %v414
  %v447 = vpack.c.bf16 %v417, %v416
  %v448 = vpack.c.bf16 %v419, %v418
  %v449 = vpack.c.bf16 %v421, %v420
  %v450 = vpack.c.bf16 %v423, %v422
  %v451 = vpack.c.bf16 %v425, %v424
  %v452 = vpack.c.bf16 %v427, %v426
  %v453 = vpack.c.bf16 %v429, %v428
  %v454 = vpack.c.bf16 %v431, %v430
  %v455 = vpack.c.bf16 %v433, %v432
  %v456 = vpack.c.bf16 %v435, %v434
  %v457 = vpack.c.bf16 %v437, %v436
  %v458 = vpack.c.bf16 %v439, %v438
  %v459 = vpack.c.bf16 %v441, %v440
  %v460 = vpack.c.bf16 %v443, %v442
  %v461 = vpack.c.bf16 %v445, %v444
  %v462 = vld [vmem:[%s3] sm:$0xf]
  %v463 = vld [vmem:[%s3 + $0x4] sm:$0xf]
  %v464 = vld [vmem:[%s3 + $0x8] sm:$0xf]
  %v465 = vld [vmem:[%s3 + $0xc] sm:$0xf]
  %v466 = vld [vmem:[%s3 + $0x10] sm:$0xf]
  %v467 = vld [vmem:[%s3 + $0x14] sm:$0xf]
  %v468 = vld [vmem:[%s3 + $0x18] sm:$0xf]
  %v469 = vld [vmem:[%s3 + $0x1c] sm:$0xf]
  %v470 = vld [vmem:[%s4] sm:$0x1]
  %v472 = vlaneseq
  %v473 = vshrl.u32 %v472, 7
  %v474 = vsub.s32 0, %v473
  %v475 = vrot.slane %v470, %v474
  %v485 = vunpack.c.l.b16 %v462
  %v486 = vunpack.c.l.b16 %v463
  %v487 = vunpack.c.l.b16 %v464
  %v488 = vunpack.c.l.b16 %v465
  %v489 = vunpack.c.l.b16 %v466
  %v490 = vunpack.c.l.b16 %v467
  %v491 = vunpack.c.l.b16 %v468
  %v492 = vunpack.c.l.b16 %v469
  %v493 = vpack.c.b16 %v486, %v485
  %v494 = vpack.c.b16 %v488, %v487
  %v495 = vpack.c.b16 %v490, %v489
  %v496 = vpack.c.b16 %v492, %v491
  %vm501 = vcmask 523264
  %v503 = vsel %vm501, %v446, 0
  %v506 = vsel %vm501, %v447, 0
  %v509 = vsel %vm501, %v448, 0
  %v512 = vsel %vm501, %v449, 0
  %v515 = vsel %vm501, %v450, 0
  %v518 = vsel %vm501, %v451, 0
  %v521 = vsel %vm501, %v452, 0
  %v524 = vsel %vm501, %v453, 0
  %v527 = vsel %vm501, %v454, 0
  %v530 = vsel %vm501, %v455, 0
  %v533 = vsel %vm501, %v456, 0
  %v536 = vsel %vm501, %v457, 0
  %v539 = vsel %vm501, %v458, 0
  %v542 = vsel %vm501, %v459, 0
  %v545 = vsel %vm501, %v460, 0
  %v548 = vsel %vm501, %v461, 0
  %550 = vmatprep.subr.bf16.mxu0 0
  %551 = vmatpush1.bf16.msra.mxu0 %v493
  %552 = vmatprep.subr.bf16.mxu0 0
  %553 = vmatpush1.bf16.msra.mxu0 %v494
  %554 = vmatprep.subr.bf16.mxu0 0
  %555 = vmatpush1.bf16.msra.mxu0 %v495
  %556 = vmatprep.subr.bf16.mxu0 0
  %557 = vmatpush1.bf16.msra.mxu0 %v496
  %558 = vmatprep.subr.bf16.mxu0 0
  %559 = vmatpush1.bf16.msra.mxu0 0
  %560 = vmatprep.subr.bf16.mxu0 0
  %561 = vmatpush1.bf16.msra.mxu0 0
  %562 = vmatprep.subr.bf16.mxu0 0
  %563 = vmatpush1.bf16.msra.mxu0 0
  %564 = vmatprep.subr.bf16.mxu0 0
  %565 = vmatpush1.bf16.msra.mxu0 0
  %566 = vmatprep.subr.bf16.mxu0 0
  %567 = vmatpush1.bf16.msra.mxu0 0
  %568 = vmatprep.subr.bf16.mxu0 0
  %569 = vmatpush1.bf16.msra.mxu0 0
  %570 = vmatprep.subr.bf16.mxu0 0
  %571 = vmatpush1.bf16.msra.mxu0 0
  %572 = vmatprep.subr.bf16.mxu0 0
  %573 = vmatpush1.bf16.msra.mxu0 0
  %574 = vmatprep.subr.bf16.mxu0 0
  %575 = vmatpush1.bf16.msra.mxu0 0
  %576 = vmatprep.subr.bf16.mxu0 0
  %577 = vmatpush1.bf16.msra.mxu0 0
  %578 = vmatprep.subr.bf16.mxu0 0
  %579 = vmatpush1.bf16.msra.mxu0 0
  %580 = vmatprep.subr.bf16.mxu0 0
  %581 = vmatpush1.bf16.msra.mxu0 0
  %582 = vmatprep.mubr.bf16.mxu0 0
  %583 = vmatmul.mubr.bf16.gmra.mrb[0].mxu0 %v503
  %v584 = vpop.f32.mrb[0].mxu0
  %v585 = vadd.f32 %v475, %v584
  %v586 = vpop.f32.mrb[0].mxu0
  %v587 = vpop.f32.mrb[0].mxu0
  %v588 = vadd.f32 %v475, %v587
  %v589 = vpop.f32.mrb[0].mxu0
  %590 = vmatprep.mubr.bf16.mxu0 0
  %591 = vmatmul.mubr.bf16.gmra.mrb[0].mxu0 %v506
  %v592 = vpop.f32.mrb[0].mxu0
  %v593 = vadd.f32 %v475, %v592
  %v594 = vpop.f32.mrb[0].mxu0
  %v595 = vpop.f32.mrb[0].mxu0
  %v596 = vadd.f32 %v475, %v595
  %v597 = vpop.f32.mrb[0].mxu0
  %598 = vmatprep.mubr.bf16.mxu0 0
  %599 = vmatmul.mubr.bf16.gmra.mrb[0].mxu0 %v509
  %v600 = vpop.f32.mrb[0].mxu0
  %v601 = vadd.f32 %v475, %v600
  %v602 = vpop.f32.mrb[0].mxu0
  %v603 = vpop.f32.mrb[0].mxu0
  %v604 = vadd.f32 %v475, %v603
  %v605 = vpop.f32.mrb[0].mxu0
  %606 = vmatprep.mubr.bf16.mxu0 0
  %607 = vmatmul.mubr.bf16.gmra.mrb[0].mxu0 %v512
  %v608 = vpop.f32.mrb[0].mxu0
  %v609 = vadd.f32 %v475, %v608
  %v610 = vpop.f32.mrb[0].mxu0
  %v611 = vpop.f32.mrb[0].mxu0
  %v612 = vadd.f32 %v475, %v611
  %v613 = vpop.f32.mrb[0].mxu0
  %614 = vmatprep.mubr.bf16.mxu0 0
  %615 = vmatmul.mubr.bf16.gmra.mrb[0].mxu0 %v515
  %v616 = vpop.f32.mrb[0].mxu0
  %v617 = vadd.f32 %v475, %v616
  %v618 = vpop.f32.mrb[0].mxu0
  %v619 = vpop.f32.mrb[0].mxu0
  %v620 = vadd.f32 %v475, %v619
  %v621 = vpop.f32.mrb[0].mxu0
  %622 = vmatprep.mubr.bf16.mxu0 0
  %623 = vmatmul.mubr.bf16.gmra.mrb[0].mxu0 %v518
  %v624 = vpop.f32.mrb[0].mxu0
  %v625 = vadd.f32 %v475, %v624
  %v626 = vpop.f32.mrb[0].mxu0
  %v627 = vpop.f32.mrb[0].mxu0
  %v628 = vadd.f32 %v475, %v627
  %v629 = vpop.f32.mrb[0].mxu0
  %630 = vmatprep.mubr.bf16.mxu0 0
  %631 = vmatmul.mubr.bf16.gmra.mrb[0].mxu0 %v521
  %v632 = vpop.f32.mrb[0].mxu0
  %v633 = vadd.f32 %v475, %v632
  %v634 = vpop.f32.mrb[0].mxu0
  %v635 = vpop.f32.mrb[0].mxu0
  %v636 = vadd.f32 %v475, %v635
  %v637 = vpop.f32.mrb[0].mxu0
  %638 = vmatprep.mubr.bf16.mxu0 0
  %639 = vmatmul.mubr.bf16.gmra.mrb[0].mxu0 %v524
  %v640 = vpop.f32.mrb[0].mxu0
  %v641 = vadd.f32 %v475, %v640
  %v642 = vpop.f32.mrb[0].mxu0
  %v643 = vpop.f32.mrb[0].mxu0
  %v644 = vadd.f32 %v475, %v643
  %v645 = vpop.f32.mrb[0].mxu0
  %646 = vmatprep.mubr.bf16.mxu0 0
  %647 = vmatmul.mubr.bf16.gmra.mrb[0].mxu0 %v527
  %v648 = vpop.f32.mrb[0].mxu0
  %v649 = vadd.f32 %v475, %v648
  %v650 = vpop.f32.mrb[0].mxu0
  %v651 = vpop.f32.mrb[0].mxu0
  %v652 = vadd.f32 %v475, %v651
  %v653 = vpop.f32.mrb[0].mxu0
  %654 = vmatprep.mubr.bf16.mxu0 0
  %655 = vmatmul.mubr.bf16.gmra.mrb[0].mxu0 %v530
  %v656 = vpop.f32.mrb[0].mxu0
  %v657 = vadd.f32 %v475, %v656
  %v658 = vpop.f32.mrb[0].mxu0
  %v659 = vpop.f32.mrb[0].mxu0
  %v660 = vadd.f32 %v475, %v659
  %v661 = vpop.f32.mrb[0].mxu0
  %662 = vmatprep.mubr.bf16.mxu0 0
  %663 = vmatmul.mubr.bf16.gmra.mrb[0].mxu0 %v533
  %v664 = vpop.f32.mrb[0].mxu0
  %v665 = vadd.f32 %v475, %v664
  %v666 = vpop.f32.mrb[0].mxu0
  %v667 = vpop.f32.mrb[0].mxu0
  %v668 = vadd.f32 %v475, %v667
  %v669 = vpop.f32.mrb[0].mxu0
  %670 = vmatprep.mubr.bf16.mxu0 0
  %671 = vmatmul.mubr.bf16.gmra.mrb[0].mxu0 %v536
  %v672 = vpop.f32.mrb[0].mxu0
  %v673 = vadd.f32 %v475, %v672
  %v674 = vpop.f32.mrb[0].mxu0
  %v675 = vpop.f32.mrb[0].mxu0
  %v676 = vadd.f32 %v475, %v675
  %v677 = vpop.f32.mrb[0].mxu0
  %678 = vmatprep.mubr.bf16.mxu0 0
  %679 = vmatmul.mubr.bf16.gmra.mrb[0].mxu0 %v539
  %v680 = vpop.f32.mrb[0].mxu0
  %v681 = vadd.f32 %v475, %v680
  %v682 = vpop.f32.mrb[0].mxu0
  %v683 = vpop.f32.mrb[0].mxu0
  %v684 = vadd.f32 %v475, %v683
  %v685 = vpop.f32.mrb[0].mxu0
  %686 = vmatprep.mubr.bf16.mxu0 0
  %687 = vmatmul.mubr.bf16.gmra.mrb[0].mxu0 %v542
  %v688 = vpop.f32.mrb[0].mxu0
  %v689 = vadd.f32 %v475, %v688
  %v690 = vpop.f32.mrb[0].mxu0
  %v691 = vpop.f32.mrb[0].mxu0
  %v692 = vadd.f32 %v475, %v691
  %v693 = vpop.f32.mrb[0].mxu0
  %694 = vmatprep.mubr.bf16.mxu0 0
  %695 = vmatmul.mubr.bf16.gmra.mrb[0].mxu0 %v545
  %v696 = vpop.f32.mrb[0].mxu0
  %v697 = vadd.f32 %v475, %v696
  %v698 = vpop.f32.mrb[0].mxu0
  %v699 = vpop.f32.mrb[0].mxu0
  %v700 = vadd.f32 %v475, %v699
  %v701 = vpop.f32.mrb[0].mxu0
  %702 = vmatprep.mubr.bf16.mxu0 0
  %703 = vmatmul.mubr.bf16.gmra.mrb[0].mxu0 %v548
  %v704 = vpop.f32.mrb[0].mxu0
  %v705 = vadd.f32 %v475, %v704
  %v706 = vpop.f32.mrb[0].mxu0
  %v707 = vpop.f32.mrb[0].mxu0
  %v708 = vadd.f32 %v475, %v707
  %v709 = vpop.f32.mrb[0].mxu0
  %710 = vdwg.mxu0
  %v711 = vmax.f32 %v585, 0.0
  %v712 = vmax.f32 %v588, 0.0
  %v713 = vmax.f32 %v593, 0.0
  %v714 = vmax.f32 %v596, 0.0
  %v715 = vmax.f32 %v601, 0.0
  %v716 = vmax.f32 %v604, 0.0
  %v717 = vmax.f32 %v609, 0.0
  %v718 = vmax.f32 %v612, 0.0
  %v719 = vmax.f32 %v617, 0.0
  %v720 = vmax.f32 %v620, 0.0
  %v721 = vmax.f32 %v625, 0.0
  %v722 = vmax.f32 %v628, 0.0
  %v723 = vmax.f32 %v633, 0.0
  %v724 = vmax.f32 %v636, 0.0
  %v725 = vmax.f32 %v641, 0.0
  %v726 = vmax.f32 %v644, 0.0
  %v727 = vmax.f32 %v649, 0.0
  %v728 = vmax.f32 %v652, 0.0
  %v729 = vmax.f32 %v657, 0.0
  %v730 = vmax.f32 %v660, 0.0
  %v731 = vmax.f32 %v665, 0.0
  %v732 = vmax.f32 %v668, 0.0
  %v733 = vmax.f32 %v673, 0.0
  %v734 = vmax.f32 %v676, 0.0
  %v735 = vmax.f32 %v681, 0.0
  %v736 = vmax.f32 %v684, 0.0
  %v737 = vmax.f32 %v689, 0.0
  %v738 = vmax.f32 %v692, 0.0
  %v739 = vmax.f32 %v697, 0.0
  %v740 = vmax.f32 %v700, 0.0
  %v741 = vmax.f32 %v705, 0.0
  %v742 = vmax.f32 %v708, 0.0
  %v743 = vld [vmem:[%s8] sm:$0x1]
  %v745 = vlaneseq
  %v746 = vshrl.u32 %v745, 7
  %v747 = vsub.s32 0, %v746
  %v748 = vrot.slane %v743, %v747
  %v750 = vmul.f32 %v711, %v748
  %v751 = vmul.f32 %v712, %v748
  %v752 = vmul.f32 %v713, %v748
  %v753 = vmul.f32 %v714, %v748
  %v754 = vmul.f32 %v715, %v748
  %v755 = vmul.f32 %v716, %v748
  %v756 = vmul.f32 %v717, %v748
  %v757 = vmul.f32 %v718, %v748
  %v758 = vmul.f32 %v719, %v748
  %v759 = vmul.f32 %v720, %v748
  %v760 = vmul.f32 %v721, %v748
  %v761 = vmul.f32 %v722, %v748
  %v762 = vmul.f32 %v723, %v748
  %v763 = vmul.f32 %v724, %v748
  %v764 = vmul.f32 %v725, %v748
  %v765 = vmul.f32 %v726, %v748
  %v766 = vmul.f32 %v727, %v748
  %v767 = vmul.f32 %v728, %v748
  %v768 = vmul.f32 %v729, %v748
  %v769 = vmul.f32 %v730, %v748
  %v770 = vmul.f32 %v731, %v748
  %v771 = vmul.f32 %v732, %v748
  %v772 = vmul.f32 %v733, %v748
  %v773 = vmul.f32 %v734, %v748
  %v774 = vmul.f32 %v735, %v748
  %v775 = vmul.f32 %v736, %v748
  %v776 = vmul.f32 %v737, %v748
  %v777 = vmul.f32 %v738, %v748
  %v778 = vmul.f32 %v739, %v748
  %v779 = vmul.f32 %v740, %v748
  %v780 = vmul.f32 %v741, %v748
  %v781 = vmul.f32 %v742, %v748
  %v782 = vsel %vm501, %v750, 0.0
  %783 = vadd.xlane.f32.xlu0 %v782
  %v784 = vpop.xlane.xlu0 %783
  %v785 = vsel %vm501, %v751, 0.0
  %786 = vadd.xlane.f32.xlu0 %v785
  %v787 = vpop.xlane.xlu0 %786
  %v788 = vsel %vm501, %v752, 0.0
  %789 = vadd.xlane.f32.xlu0 %v788
  %v790 = vpop.xlane.xlu0 %789
  %v791 = vsel %vm501, %v753, 0.0
  %792 = vadd.xlane.f32.xlu0 %v791
  %v793 = vpop.xlane.xlu0 %792
  %v794 = vsel %vm501, %v754, 0.0
  %795 = vadd.xlane.f32.xlu0 %v794
  %v796 = vpop.xlane.xlu0 %795
  %v797 = vsel %vm501, %v755, 0.0
  %798 = vadd.xlane.f32.xlu0 %v797
  %v799 = vpop.xlane.xlu0 %798
  %v800 = vsel %vm501, %v756, 0.0
  %801 = vadd.xlane.f32.xlu0 %v800
  %v802 = vpop.xlane.xlu0 %801
  %v803 = vsel %vm501, %v757, 0.0
  %804 = vadd.xlane.f32.xlu0 %v803
  %v805 = vpop.xlane.xlu0 %804
  %v806 = vsel %vm501, %v758, 0.0
  %807 = vadd.xlane.f32.xlu0 %v806
  %v808 = vpop.xlane.xlu0 %807
  %v809 = vsel %vm501, %v759, 0.0
  %810 = vadd.xlane.f32.xlu0 %v809
  %v811 = vpop.xlane.xlu0 %810
  %v812 = vsel %vm501, %v760, 0.0
  %813 = vadd.xlane.f32.xlu0 %v812
  %v814 = vpop.xlane.xlu0 %813
  %v815 = vsel %vm501, %v761, 0.0
  %816 = vadd.xlane.f32.xlu0 %v815
  %v817 = vpop.xlane.xlu0 %816
  %v818 = vsel %vm501, %v762, 0.0
  %819 = vadd.xlane.f32.xlu0 %v818
  %v820 = vpop.xlane.xlu0 %819
  %v821 = vsel %vm501, %v763, 0.0
  %822 = vadd.xlane.f32.xlu0 %v821
  %v823 = vpop.xlane.xlu0 %822
  %v824 = vsel %vm501, %v764, 0.0
  %825 = vadd.xlane.f32.xlu0 %v824
  %v826 = vpop.xlane.xlu0 %825
  %v827 = vsel %vm501, %v765, 0.0
  %828 = vadd.xlane.f32.xlu0 %v827
  %v829 = vpop.xlane.xlu0 %828
  %v830 = vsel %vm501, %v766, 0.0
  %831 = vadd.xlane.f32.xlu0 %v830
  %v832 = vpop.xlane.xlu0 %831
  %v833 = vsel %vm501, %v767, 0.0
  %834 = vadd.xlane.f32.xlu0 %v833
  %v835 = vpop.xlane.xlu0 %834
  %v836 = vsel %vm501, %v768, 0.0
  %837 = vadd.xlane.f32.xlu0 %v836
  %v838 = vpop.xlane.xlu0 %837
  %v839 = vsel %vm501, %v769, 0.0
  %840 = vadd.xlane.f32.xlu0 %v839
  %v841 = vpop.xlane.xlu0 %840
  %v842 = vsel %vm501, %v770, 0.0
  %843 = vadd.xlane.f32.xlu0 %v842
  %v844 = vpop.xlane.xlu0 %843
  %v845 = vsel %vm501, %v771, 0.0
  %846 = vadd.xlane.f32.xlu0 %v845
  %v847 = vpop.xlane.xlu0 %846
  %v848 = vsel %vm501, %v772, 0.0
  %849 = vadd.xlane.f32.xlu0 %v848
  %v850 = vpop.xlane.xlu0 %849
  %v851 = vsel %vm501, %v773, 0.0
  %852 = vadd.xlane.f32.xlu0 %v851
  %v853 = vpop.xlane.xlu0 %852
  %v854 = vsel %vm501, %v774, 0.0
  %855 = vadd.xlane.f32.xlu0 %v854
  %v856 = vpop.xlane.xlu0 %855
  %v857 = vsel %vm501, %v775, 0.0
  %858 = vadd.xlane.f32.xlu0 %v857
  %v859 = vpop.xlane.xlu0 %858
  %v860 = vsel %vm501, %v776, 0.0
  %861 = vadd.xlane.f32.xlu0 %v860
  %v862 = vpop.xlane.xlu0 %861
  %v863 = vsel %vm501, %v777, 0.0
  %864 = vadd.xlane.f32.xlu0 %v863
  %v865 = vpop.xlane.xlu0 %864
  %v866 = vsel %vm501, %v778, 0.0
  %867 = vadd.xlane.f32.xlu0 %v866
  %v868 = vpop.xlane.xlu0 %867
  %v869 = vsel %vm501, %v779, 0.0
  %870 = vadd.xlane.f32.xlu0 %v869
  %v871 = vpop.xlane.xlu0 %870
  %v872 = vsel %vm501, %v780, 0.0
  %873 = vadd.xlane.f32.xlu0 %v872
  %v874 = vpop.xlane.xlu0 %873
  %v875 = vsel %vm501, %v781, 0.0
  %876 = vadd.xlane.f32.xlu0 %v875
  %v877 = vpop.xlane.xlu0 %876
  %v878 = vpack.c.bf16 %v712, %v711
  %v879 = vpack.c.bf16 %v714, %v713
  %v880 = vpack.c.bf16 %v716, %v715
  %v881 = vpack.c.bf16 %v718, %v717
  %v882 = vpack.c.bf16 %v720, %v719
  %v883 = vpack.c.bf16 %v722, %v721
  %v884 = vpack.c.bf16 %v724, %v723
  %v885 = vpack.c.bf16 %v726, %v725
  %v886 = vpack.c.bf16 %v728, %v727
  %v887 = vpack.c.bf16 %v730, %v729
  %v888 = vpack.c.bf16 %v732, %v731
  %v889 = vpack.c.bf16 %v734, %v733
  %v890 = vpack.c.bf16 %v736, %v735
  %v891 = vpack.c.bf16 %v738, %v737
  %v892 = vpack.c.bf16 %v740, %v739
  %v893 = vpack.c.bf16 %v742, %v741
  %v894 = vld [vmem:[%s5] sm:$0xf]
  %v895 = vld [vmem:[%s5 + $0x4] sm:$0xf]
  %v896 = vld [vmem:[%s5 + $0x8] sm:$0xf]
  %v897 = vld [vmem:[%s5 + $0xc] sm:$0xf]
  %v898 = vld [vmem:[%s5 + $0x10] sm:$0xf]
  %v899 = vld [vmem:[%s5 + $0x14] sm:$0xf]
  %v900 = vld [vmem:[%s5 + $0x18] sm:$0xf]
  %v901 = vld [vmem:[%s5 + $0x1c] sm:$0xf]
  %v902 = vld [vmem:[%s7] sm:$0xf]
  %v903 = vld [vmem:[%s7 + $0x4] sm:$0xf]
  %v904 = vld [vmem:[%s7 + $0x8] sm:$0xf]
  %v905 = vld [vmem:[%s7 + $0xc] sm:$0xf]
  %v906 = vld [vmem:[%s7 + $0x10] sm:$0xf]
  %v907 = vld [vmem:[%s7 + $0x14] sm:$0xf]
  %v908 = vld [vmem:[%s7 + $0x18] sm:$0xf]
  %v909 = vld [vmem:[%s7 + $0x1c] sm:$0xf]
  %v910 = vld [vmem:[%s7 + $0x20] sm:$0x1]
  %v920 = vunpack.c.l.b16 %v902
  %v921 = vunpack.c.l.b16 %v903
  %v922 = vunpack.c.l.b16 %v904
  %v923 = vunpack.c.l.b16 %v905
  %v924 = vunpack.c.l.b16 %v906
  %v925 = vunpack.c.l.b16 %v907
  %v926 = vunpack.c.l.b16 %v908
  %v927 = vunpack.c.l.b16 %v909
  %v928 = vunpack.c.l.b16 %v910
  %v929 = vpack.c.b16 %v921, %v920
  %v930 = vpack.c.b16 %v923, %v922
  %v931 = vpack.c.b16 %v925, %v924
  %v932 = vpack.c.b16 %v927, %v926
  %v933 = vpack.c.b16 %v928, %v928
  %v939 = vsel %vm249, %v933, 0
  %941 = vmatprep.subr.bf16.mxu0 0
  %942 = vmatpush1.bf16.msra.mxu0 %v929
  %943 = vmatprep.subr.bf16.mxu0 0
  %944 = vmatpush1.bf16.msra.mxu0 %v930
  %945 = vmatprep.subr.bf16.mxu0 0
  %946 = vmatpush1.bf16.msra.mxu0 %v931
  %947 = vmatprep.subr.bf16.mxu0 0
  %948 = vmatpush1.bf16.msra.mxu0 %v932
  %949 = vmatprep.subr.bf16.mxu0 0
  %950 = vmatpush1.bf16.msra.mxu0 %v939
  %951 = vmatprep.subr.bf16.mxu0 0
  %952 = vmatpush1.bf16.msra.mxu0 0
  %953 = vmatprep.subr.bf16.mxu0 0
  %954 = vmatpush1.bf16.msra.mxu0 0
  %955 = vmatprep.subr.bf16.mxu0 0
  %956 = vmatpush1.bf16.msra.mxu0 0
  %957 = vmatprep.subr.bf16.mxu0 0
  %958 = vmatpush1.bf16.msra.mxu0 0
  %959 = vmatprep.subr.bf16.mxu0 0
  %960 = vmatpush1.bf16.msra.mxu0 0
  %961 = vmatprep.subr.bf16.mxu0 0
  %962 = vmatpush1.bf16.msra.mxu0 0
  %963 = vmatprep.subr.bf16.mxu0 0
  %964 = vmatpush1.bf16.msra.mxu0 0
  %965 = vmatprep.subr.bf16.mxu0 0
  %966 = vmatpush1.bf16.msra.mxu0 0
  %967 = vmatprep.subr.bf16.mxu0 0
  %968 = vmatpush1.bf16.msra.mxu0 0
  %969 = vmatprep.subr.bf16.mxu0 0
  %970 = vmatpush1.bf16.msra.mxu0 0
  %971 = vmatprep.subr.bf16.mxu0 0
  %972 = vmatpush1.bf16.msra.mxu0 0
  %973 = vmatprep.mubr.bf16.mxu0 0
  %974 = vmatmul.mubr.bf16.gmra.mrb[0].mxu0 %v202
  %v975 = vpop.f32.mrb[0].mxu0
  %v976 = vadd.f32 0.0, %v975
  %v977 = vpop.f32.mrb[0].mxu0
  %v978 = vpop.f32.mrb[0].mxu0
  %v979 = vadd.f32 0.0, %v978
  %v980 = vpop.f32.mrb[0].mxu0
  %981 = vmatprep.mubr.bf16.mxu0 0
  %982 = vmatmul.mubr.bf16.gmra.mrb[0].mxu0 %v205
  %v983 = vpop.f32.mrb[0].mxu0
  %v984 = vadd.f32 0.0, %v983
  %v985 = vpop.f32.mrb[0].mxu0
  %v986 = vpop.f32.mrb[0].mxu0
  %v987 = vadd.f32 0.0, %v986
  %v988 = vpop.f32.mrb[0].mxu0
  %989 = vmatprep.mubr.bf16.mxu0 0
  %990 = vmatmul.mubr.bf16.gmra.mrb[0].mxu0 %v208
  %v991 = vpop.f32.mrb[0].mxu0
  %v992 = vadd.f32 0.0, %v991
  %v993 = vpop.f32.mrb[0].mxu0
  %v994 = vpop.f32.mrb[0].mxu0
  %v995 = vadd.f32 0.0, %v994
  %v996 = vpop.f32.mrb[0].mxu0
  %997 = vmatprep.mubr.bf16.mxu0 0
  %998 = vmatmul.mubr.bf16.gmra.mrb[0].mxu0 %v211
  %v999 = vpop.f32.mrb[0].mxu0
  %v1000 = vadd.f32 0.0, %v999
  %v1001 = vpop.f32.mrb[0].mxu0
  %v1002 = vpop.f32.mrb[0].mxu0
  %v1003 = vadd.f32 0.0, %v1002
  %v1004 = vpop.f32.mrb[0].mxu0
  %1005 = vmatprep.mubr.bf16.mxu0 0
  %1006 = vmatmul.mubr.bf16.gmra.mrb[0].mxu0 %v214
  %v1007 = vpop.f32.mrb[0].mxu0
  %v1008 = vadd.f32 0.0, %v1007
  %v1009 = vpop.f32.mrb[0].mxu0
  %v1010 = vpop.f32.mrb[0].mxu0
  %v1011 = vadd.f32 0.0, %v1010
  %v1012 = vpop.f32.mrb[0].mxu0
  %1013 = vmatprep.mubr.bf16.mxu0 0
  %1014 = vmatmul.mubr.bf16.gmra.mrb[0].mxu0 %v217
  %v1015 = vpop.f32.mrb[0].mxu0
  %v1016 = vadd.f32 0.0, %v1015
  %v1017 = vpop.f32.mrb[0].mxu0
  %v1018 = vpop.f32.mrb[0].mxu0
  %v1019 = vadd.f32 0.0, %v1018
  %v1020 = vpop.f32.mrb[0].mxu0
  %1021 = vmatprep.mubr.bf16.mxu0 0
  %1022 = vmatmul.mubr.bf16.gmra.mrb[0].mxu0 %v220
  %v1023 = vpop.f32.mrb[0].mxu0
  %v1024 = vadd.f32 0.0, %v1023
  %v1025 = vpop.f32.mrb[0].mxu0
  %v1026 = vpop.f32.mrb[0].mxu0
  %v1027 = vadd.f32 0.0, %v1026
  %v1028 = vpop.f32.mrb[0].mxu0
  %1029 = vmatprep.mubr.bf16.mxu0 0
  %1030 = vmatmul.mubr.bf16.gmra.mrb[0].mxu0 %v223
  %v1031 = vpop.f32.mrb[0].mxu0
  %v1032 = vadd.f32 0.0, %v1031
  %v1033 = vpop.f32.mrb[0].mxu0
  %v1034 = vpop.f32.mrb[0].mxu0
  %v1035 = vadd.f32 0.0, %v1034
  %v1036 = vpop.f32.mrb[0].mxu0
  %1037 = vmatprep.mubr.bf16.mxu0 0
  %1038 = vmatmul.mubr.bf16.gmra.mrb[0].mxu0 %v226
  %v1039 = vpop.f32.mrb[0].mxu0
  %v1040 = vadd.f32 0.0, %v1039
  %v1041 = vpop.f32.mrb[0].mxu0
  %v1042 = vpop.f32.mrb[0].mxu0
  %v1043 = vadd.f32 0.0, %v1042
  %v1044 = vpop.f32.mrb[0].mxu0
  %1045 = vmatprep.mubr.bf16.mxu0 0
  %1046 = vmatmul.mubr.bf16.gmra.mrb[0].mxu0 %v229
  %v1047 = vpop.f32.mrb[0].mxu0
  %v1048 = vadd.f32 0.0, %v1047
  %v1049 = vpop.f32.mrb[0].mxu0
  %v1050 = vpop.f32.mrb[0].mxu0
  %v1051 = vadd.f32 0.0, %v1050
  %v1052 = vpop.f32.mrb[0].mxu0
  %1053 = vmatprep.mubr.bf16.mxu0 0
  %1054 = vmatmul.mubr.bf16.gmra.mrb[0].mxu0 %v232
  %v1055 = vpop.f32.mrb[0].mxu0
  %v1056 = vadd.f32 0.0, %v1055
  %v1057 = vpop.f32.mrb[0].mxu0
  %v1058 = vpop.f32.mrb[0].mxu0
  %v1059 = vadd.f32 0.0, %v1058
  %v1060 = vpop.f32.mrb[0].mxu0
  %1061 = vmatprep.mubr.bf16.mxu0 0
  %1062 = vmatmul.mubr.bf16.gmra.mrb[0].mxu0 %v235
  %v1063 = vpop.f32.mrb[0].mxu0
  %v1064 = vadd.f32 0.0, %v1063
  %v1065 = vpop.f32.mrb[0].mxu0
  %v1066 = vpop.f32.mrb[0].mxu0
  %v1067 = vadd.f32 0.0, %v1066
  %v1068 = vpop.f32.mrb[0].mxu0
  %1069 = vmatprep.mubr.bf16.mxu0 0
  %1070 = vmatmul.mubr.bf16.gmra.mrb[0].mxu0 %v238
  %v1071 = vpop.f32.mrb[0].mxu0
  %v1072 = vadd.f32 0.0, %v1071
  %v1073 = vpop.f32.mrb[0].mxu0
  %v1074 = vpop.f32.mrb[0].mxu0
  %v1075 = vadd.f32 0.0, %v1074
  %v1076 = vpop.f32.mrb[0].mxu0
  %1077 = vmatprep.mubr.bf16.mxu0 0
  %1078 = vmatmul.mubr.bf16.gmra.mrb[0].mxu0 %v241
  %v1079 = vpop.f32.mrb[0].mxu0
  %v1080 = vadd.f32 0.0, %v1079
  %v1081 = vpop.f32.mrb[0].mxu0
  %v1082 = vpop.f32.mrb[0].mxu0
  %v1083 = vadd.f32 0.0, %v1082
  %v1084 = vpop.f32.mrb[0].mxu0
  %1085 = vmatprep.mubr.bf16.mxu0 0
  %1086 = vmatmul.mubr.bf16.gmra.mrb[0].mxu0 %v244
  %v1087 = vpop.f32.mrb[0].mxu0
  %v1088 = vadd.f32 0.0, %v1087
  %v1089 = vpop.f32.mrb[0].mxu0
  %v1090 = vpop.f32.mrb[0].mxu0
  %v1091 = vadd.f32 0.0, %v1090
  %v1092 = vpop.f32.mrb[0].mxu0
  %1093 = vmatprep.mubr.bf16.mxu0 0
  %1094 = vmatmul.mubr.bf16.gmra.mrb[0].mxu0 %v247
  %v1095 = vpop.f32.mrb[0].mxu0
  %v1096 = vadd.f32 0.0, %v1095
  %v1097 = vpop.f32.mrb[0].mxu0
  %v1098 = vpop.f32.mrb[0].mxu0
  %v1099 = vadd.f32 0.0, %v1098
  %v1100 = vpop.f32.mrb[0].mxu0
  %1101 = vdwg.mxu0
  %v1110 = vunpack.c.l.b16 %v894
  %v1111 = vunpack.c.l.b16 %v895
  %v1112 = vunpack.c.l.b16 %v896
  %v1113 = vunpack.c.l.b16 %v897
  %v1114 = vunpack.c.l.b16 %v898
  %v1115 = vunpack.c.l.b16 %v899
  %v1116 = vunpack.c.l.b16 %v900
  %v1117 = vunpack.c.l.b16 %v901
  %v1118 = vpack.c.b16 %v1111, %v1110
  %v1119 = vpack.c.b16 %v1113, %v1112
  %v1120 = vpack.c.b16 %v1115, %v1114
  %v1121 = vpack.c.b16 %v1117, %v1116
  %v1127 = vsel %vm501, %v878, 0
  %v1130 = vsel %vm501, %v879, 0
  %v1133 = vsel %vm501, %v880, 0
  %v1136 = vsel %vm501, %v881, 0
  %v1139 = vsel %vm501, %v882, 0
  %v1142 = vsel %vm501, %v883, 0
  %v1145 = vsel %vm501, %v884, 0
  %v1148 = vsel %vm501, %v885, 0
  %v1151 = vsel %vm501, %v886, 0
  %v1154 = vsel %vm501, %v887, 0
  %v1157 = vsel %vm501, %v888, 0
  %v1160 = vsel %vm501, %v889, 0
  %v1163 = vsel %vm501, %v890, 0
  %v1166 = vsel %vm501, %v891, 0
  %v1169 = vsel %vm501, %v892, 0
  %v1172 = vsel %vm501, %v893, 0
  %1174 = vmatprep.subr.bf16.mxu0 0
  %1175 = vmatpush1.bf16.msra.mxu0 %v1118
  %1176 = vmatprep.subr.bf16.mxu0 0
  %1177 = vmatpush1.bf16.msra.mxu0 %v1119
  %1178 = vmatprep.subr.bf16.mxu0 0
  %1179 = vmatpush1.bf16.msra.mxu0 %v1120
  %1180 = vmatprep.subr.bf16.mxu0 0
  %1181 = vmatpush1.bf16.msra.mxu0 %v1121
  %1182 = vmatprep.subr.bf16.mxu0 0
  %1183 = vmatpush1.bf16.msra.mxu0 0
  %1184 = vmatprep.subr.bf16.mxu0 0
  %1185 = vmatpush1.bf16.msra.mxu0 0
  %1186 = vmatprep.subr.bf16.mxu0 0
  %1187 = vmatpush1.bf16.msra.mxu0 0
  %1188 = vmatprep.subr.bf16.mxu0 0
  %1189 = vmatpush1.bf16.msra.mxu0 0
  %1190 = vmatprep.subr.bf16.mxu0 0
  %1191 = vmatpush1.bf16.msra.mxu0 0
  %1192 = vmatprep.subr.bf16.mxu0 0
  %1193 = vmatpush1.bf16.msra.mxu0 0
  %1194 = vmatprep.subr.bf16.mxu0 0
  %1195 = vmatpush1.bf16.msra.mxu0 0
  %1196 = vmatprep.subr.bf16.mxu0 0
  %1197 = vmatpush1.bf16.msra.mxu0 0
  %1198 = vmatprep.subr.bf16.mxu0 0
  %1199 = vmatpush1.bf16.msra.mxu0 0
  %1200 = vmatprep.subr.bf16.mxu0 0
  %1201 = vmatpush1.bf16.msra.mxu0 0
  %1202 = vmatprep.subr.bf16.mxu0 0
  %1203 = vmatpush1.bf16.msra.mxu0 0
  %1204 = vmatprep.subr.bf16.mxu0 0
  %1205 = vmatpush1.bf16.msra.mxu0 0
  %1206 = vmatprep.mubr.bf16.mxu0 0
  %1207 = vmatmul.mubr.bf16.gmra.mrb[0].mxu0 %v1127
  %v1208 = vpop.f32.mrb[0].mxu0
  %v1209 = vadd.f32 %v976, %v1208
  %v1210 = vpop.f32.mrb[0].mxu0
  %v1211 = vpop.f32.mrb[0].mxu0
  %v1212 = vadd.f32 %v979, %v1211
  %v1213 = vpop.f32.mrb[0].mxu0
  %1214 = vmatprep.mubr.bf16.mxu0 0
  %1215 = vmatmul.mubr.bf16.gmra.mrb[0].mxu0 %v1130
  %v1216 = vpop.f32.mrb[0].mxu0
  %v1217 = vadd.f32 %v984, %v1216
  %v1218 = vpop.f32.mrb[0].mxu0
  %v1219 = vpop.f32.mrb[0].mxu0
  %v1220 = vadd.f32 %v987, %v1219
  %v1221 = vpop.f32.mrb[0].mxu0
  %1222 = vmatprep.mubr.bf16.mxu0 0
  %1223 = vmatmul.mubr.bf16.gmra.mrb[0].mxu0 %v1133
  %v1224 = vpop.f32.mrb[0].mxu0
  %v1225 = vadd.f32 %v992, %v1224
  %v1226 = vpop.f32.mrb[0].mxu0
  %v1227 = vpop.f32.mrb[0].mxu0
  %v1228 = vadd.f32 %v995, %v1227
  %v1229 = vpop.f32.mrb[0].mxu0
  %1230 = vmatprep.mubr.bf16.mxu0 0
  %1231 = vmatmul.mubr.bf16.gmra.mrb[0].mxu0 %v1136
  %v1232 = vpop.f32.mrb[0].mxu0
  %v1233 = vadd.f32 %v1000, %v1232
  %v1234 = vpop.f32.mrb[0].mxu0
  %v1235 = vpop.f32.mrb[0].mxu0
  %v1236 = vadd.f32 %v1003, %v1235
  %v1237 = vpop.f32.mrb[0].mxu0
  %1238 = vmatprep.mubr.bf16.mxu0 0
  %1239 = vmatmul.mubr.bf16.gmra.mrb[0].mxu0 %v1139
  %v1240 = vpop.f32.mrb[0].mxu0
  %v1241 = vadd.f32 %v1008, %v1240
  %v1242 = vpop.f32.mrb[0].mxu0
  %v1243 = vpop.f32.mrb[0].mxu0
  %v1244 = vadd.f32 %v1011, %v1243
  %v1245 = vpop.f32.mrb[0].mxu0
  %1246 = vmatprep.mubr.bf16.mxu0 0
  %1247 = vmatmul.mubr.bf16.gmra.mrb[0].mxu0 %v1142
  %v1248 = vpop.f32.mrb[0].mxu0
  %v1249 = vadd.f32 %v1016, %v1248
  %v1250 = vpop.f32.mrb[0].mxu0
  %v1251 = vpop.f32.mrb[0].mxu0
  %v1252 = vadd.f32 %v1019, %v1251
  %v1253 = vpop.f32.mrb[0].mxu0
  %1254 = vmatprep.mubr.bf16.mxu0 0
  %1255 = vmatmul.mubr.bf16.gmra.mrb[0].mxu0 %v1145
  %v1256 = vpop.f32.mrb[0].mxu0
  %v1257 = vadd.f32 %v1024, %v1256
  %v1258 = vpop.f32.mrb[0].mxu0
  %v1259 = vpop.f32.mrb[0].mxu0
  %v1260 = vadd.f32 %v1027, %v1259
  %v1261 = vpop.f32.mrb[0].mxu0
  %1262 = vmatprep.mubr.bf16.mxu0 0
  %1263 = vmatmul.mubr.bf16.gmra.mrb[0].mxu0 %v1148
  %v1264 = vpop.f32.mrb[0].mxu0
  %v1265 = vadd.f32 %v1032, %v1264
  %v1266 = vpop.f32.mrb[0].mxu0
  %v1267 = vpop.f32.mrb[0].mxu0
  %v1268 = vadd.f32 %v1035, %v1267
  %v1269 = vpop.f32.mrb[0].mxu0
  %1270 = vmatprep.mubr.bf16.mxu0 0
  %1271 = vmatmul.mubr.bf16.gmra.mrb[0].mxu0 %v1151
  %v1272 = vpop.f32.mrb[0].mxu0
  %v1273 = vadd.f32 %v1040, %v1272
  %v1274 = vpop.f32.mrb[0].mxu0
  %v1275 = vpop.f32.mrb[0].mxu0
  %v1276 = vadd.f32 %v1043, %v1275
  %v1277 = vpop.f32.mrb[0].mxu0
  %1278 = vmatprep.mubr.bf16.mxu0 0
  %1279 = vmatmul.mubr.bf16.gmra.mrb[0].mxu0 %v1154
  %v1280 = vpop.f32.mrb[0].mxu0
  %v1281 = vadd.f32 %v1048, %v1280
  %v1282 = vpop.f32.mrb[0].mxu0
  %v1283 = vpop.f32.mrb[0].mxu0
  %v1284 = vadd.f32 %v1051, %v1283
  %v1285 = vpop.f32.mrb[0].mxu0
  %1286 = vmatprep.mubr.bf16.mxu0 0
  %1287 = vmatmul.mubr.bf16.gmra.mrb[0].mxu0 %v1157
  %v1288 = vpop.f32.mrb[0].mxu0
  %v1289 = vadd.f32 %v1056, %v1288
  %v1290 = vpop.f32.mrb[0].mxu0
  %v1291 = vpop.f32.mrb[0].mxu0
  %v1292 = vadd.f32 %v1059, %v1291
  %v1293 = vpop.f32.mrb[0].mxu0
  %1294 = vmatprep.mubr.bf16.mxu0 0
  %1295 = vmatmul.mubr.bf16.gmra.mrb[0].mxu0 %v1160
  %v1296 = vpop.f32.mrb[0].mxu0
  %v1297 = vadd.f32 %v1064, %v1296
  %v1298 = vpop.f32.mrb[0].mxu0
  %v1299 = vpop.f32.mrb[0].mxu0
  %v1300 = vadd.f32 %v1067, %v1299
  %v1301 = vpop.f32.mrb[0].mxu0
  %1302 = vmatprep.mubr.bf16.mxu0 0
  %1303 = vmatmul.mubr.bf16.gmra.mrb[0].mxu0 %v1163
  %v1304 = vpop.f32.mrb[0].mxu0
  %v1305 = vadd.f32 %v1072, %v1304
  %v1306 = vpop.f32.mrb[0].mxu0
  %v1307 = vpop.f32.mrb[0].mxu0
  %v1308 = vadd.f32 %v1075, %v1307
  %v1309 = vpop.f32.mrb[0].mxu0
  %1310 = vmatprep.mubr.bf16.mxu0 0
  %1311 = vmatmul.mubr.bf16.gmra.mrb[0].mxu0 %v1166
  %v1312 = vpop.f32.mrb[0].mxu0
  %v1313 = vadd.f32 %v1080, %v1312
  %v1314 = vpop.f32.mrb[0].mxu0
  %v1315 = vpop.f32.mrb[0].mxu0
  %v1316 = vadd.f32 %v1083, %v1315
  %v1317 = vpop.f32.mrb[0].mxu0
  %1318 = vmatprep.mubr.bf16.mxu0 0
  %1319 = vmatmul.mubr.bf16.gmra.mrb[0].mxu0 %v1169
  %v1320 = vpop.f32.mrb[0].mxu0
  %v1321 = vadd.f32 %v1088, %v1320
  %v1322 = vpop.f32.mrb[0].mxu0
  %v1323 = vpop.f32.mrb[0].mxu0
  %v1324 = vadd.f32 %v1091, %v1323
  %v1325 = vpop.f32.mrb[0].mxu0
  %1326 = vmatprep.mubr.bf16.mxu0 0
  %1327 = vmatmul.mubr.bf16.gmra.mrb[0].mxu0 %v1172
  %v1328 = vpop.f32.mrb[0].mxu0
  %v1329 = vadd.f32 %v1096, %v1328
  %v1330 = vpop.f32.mrb[0].mxu0
  %v1331 = vpop.f32.mrb[0].mxu0
  %v1332 = vadd.f32 %v1099, %v1331
  %v1333 = vpop.f32.mrb[0].mxu0
  %1334 = vdwg.mxu0
  %v1335 = vld [vmem:[%s6] sm:$0x1]
  %v1337 = vlaneseq
  %v1338 = vshrl.u32 %v1337, 7
  %v1339 = vsub.s32 0, %v1338
  %v1340 = vrot.slane %v1335, %v1339
  %v1342 = vadd.f32 %v1209, %v1340
  %v1343 = vadd.f32 %v1212, %v1340
  %v1344 = vadd.f32 %v1217, %v1340
  %v1345 = vadd.f32 %v1220, %v1340
  %v1346 = vadd.f32 %v1225, %v1340
  %v1347 = vadd.f32 %v1228, %v1340
  %v1348 = vadd.f32 %v1233, %v1340
  %v1349 = vadd.f32 %v1236, %v1340
  %v1350 = vadd.f32 %v1241, %v1340
  %v1351 = vadd.f32 %v1244, %v1340
  %v1352 = vadd.f32 %v1249, %v1340
  %v1353 = vadd.f32 %v1252, %v1340
  %v1354 = vadd.f32 %v1257, %v1340
  %v1355 = vadd.f32 %v1260, %v1340
  %v1356 = vadd.f32 %v1265, %v1340
  %v1357 = vadd.f32 %v1268, %v1340
  %v1358 = vadd.f32 %v1273, %v1340
  %v1359 = vadd.f32 %v1276, %v1340
  %v1360 = vadd.f32 %v1281, %v1340
  %v1361 = vadd.f32 %v1284, %v1340
  %v1362 = vadd.f32 %v1289, %v1340
  %v1363 = vadd.f32 %v1292, %v1340
  %v1364 = vadd.f32 %v1297, %v1340
  %v1365 = vadd.f32 %v1300, %v1340
  %v1366 = vadd.f32 %v1305, %v1340
  %v1367 = vadd.f32 %v1308, %v1340
  %v1368 = vadd.f32 %v1313, %v1340
  %v1369 = vadd.f32 %v1316, %v1340
  %v1370 = vadd.f32 %v1321, %v1340
  %v1371 = vadd.f32 %v1324, %v1340
  %v1372 = vadd.f32 %v1329, %v1340
  %v1373 = vadd.f32 %v1332, %v1340
  %v1374 = vmax.f32 %v1342, 0.0
  %v1375 = vmax.f32 %v1343, 0.0
  %v1376 = vmax.f32 %v1344, 0.0
  %v1377 = vmax.f32 %v1345, 0.0
  %v1378 = vmax.f32 %v1346, 0.0
  %v1379 = vmax.f32 %v1347, 0.0
  %v1380 = vmax.f32 %v1348, 0.0
  %v1381 = vmax.f32 %v1349, 0.0
  %v1382 = vmax.f32 %v1350, 0.0
  %v1383 = vmax.f32 %v1351, 0.0
  %v1384 = vmax.f32 %v1352, 0.0
  %v1385 = vmax.f32 %v1353, 0.0
  %v1386 = vmax.f32 %v1354, 0.0
  %v1387 = vmax.f32 %v1355, 0.0
  %v1388 = vmax.f32 %v1356, 0.0
  %v1389 = vmax.f32 %v1357, 0.0
  %v1390 = vmax.f32 %v1358, 0.0
  %v1391 = vmax.f32 %v1359, 0.0
  %v1392 = vmax.f32 %v1360, 0.0
  %v1393 = vmax.f32 %v1361, 0.0
  %v1394 = vmax.f32 %v1362, 0.0
  %v1395 = vmax.f32 %v1363, 0.0
  %v1396 = vmax.f32 %v1364, 0.0
  %v1397 = vmax.f32 %v1365, 0.0
  %v1398 = vmax.f32 %v1366, 0.0
  %v1399 = vmax.f32 %v1367, 0.0
  %v1400 = vmax.f32 %v1368, 0.0
  %v1401 = vmax.f32 %v1369, 0.0
  %v1402 = vmax.f32 %v1370, 0.0
  %v1403 = vmax.f32 %v1371, 0.0
  %v1404 = vmax.f32 %v1372, 0.0
  %v1405 = vmax.f32 %v1373, 0.0
  %v1406 = vpack.c.bf16 %v1375, %v1374
  %v1407 = vpack.c.bf16 %v1377, %v1376
  %v1408 = vpack.c.bf16 %v1379, %v1378
  %v1409 = vpack.c.bf16 %v1381, %v1380
  %v1410 = vpack.c.bf16 %v1383, %v1382
  %v1411 = vpack.c.bf16 %v1385, %v1384
  %v1412 = vpack.c.bf16 %v1387, %v1386
  %v1413 = vpack.c.bf16 %v1389, %v1388
  %v1414 = vpack.c.bf16 %v1391, %v1390
  %v1415 = vpack.c.bf16 %v1393, %v1392
  %v1416 = vpack.c.bf16 %v1395, %v1394
  %v1417 = vpack.c.bf16 %v1397, %v1396
  %v1418 = vpack.c.bf16 %v1399, %v1398
  %v1419 = vpack.c.bf16 %v1401, %v1400
  %v1420 = vpack.c.bf16 %v1403, %v1402
  %v1421 = vpack.c.bf16 %v1405, %v1404
  %v1422 = vld [vmem:[%s9] sm:$0xf]
  %v1423 = vld [vmem:[%s9 + $0x4] sm:$0xf]
  %v1424 = vld [vmem:[%s9 + $0x8] sm:$0xf]
  %v1425 = vld [vmem:[%s9 + $0xc] sm:$0xf]
  %v1426 = vld [vmem:[%s10] sm:$0x1]
  %v1428 = vlaneseq
  %v1429 = vshrl.u32 %v1428, 7
  %v1430 = vsub.s32 0, %v1429
  %v1431 = vrot.slane %v1426, %v1430
  %v1437 = vunpack.c.l.b16 %v1422
  %v1438 = vunpack.c.l.b16 %v1423
  %v1439 = vunpack.c.l.b16 %v1424
  %v1440 = vunpack.c.l.b16 %v1425
  %v1441 = vpack.c.b16 %v1438, %v1437
  %v1442 = vpack.c.b16 %v1440, %v1439
  %vm1445 = vcmask 261120
  %v1447 = vsel %vm1445, %v1406, 0
  %v1450 = vsel %vm1445, %v1407, 0
  %v1453 = vsel %vm1445, %v1408, 0
  %v1456 = vsel %vm1445, %v1409, 0
  %v1459 = vsel %vm1445, %v1410, 0
  %v1462 = vsel %vm1445, %v1411, 0
  %v1465 = vsel %vm1445, %v1412, 0
  %v1468 = vsel %vm1445, %v1413, 0
  %v1471 = vsel %vm1445, %v1414, 0
  %v1474 = vsel %vm1445, %v1415, 0
  %v1477 = vsel %vm1445, %v1416, 0
  %v1480 = vsel %vm1445, %v1417, 0
  %v1483 = vsel %vm1445, %v1418, 0
  %v1486 = vsel %vm1445, %v1419, 0
  %v1489 = vsel %vm1445, %v1420, 0
  %v1492 = vsel %vm1445, %v1421, 0
  %1494 = vmatprep.subr.bf16.mxu0 0
  %1495 = vmatpush1.bf16.msra.mxu0 %v1441
  %1496 = vmatprep.subr.bf16.mxu0 0
  %1497 = vmatpush1.bf16.msra.mxu0 %v1442
  %1498 = vmatprep.subr.bf16.mxu0 0
  %1499 = vmatpush1.bf16.msra.mxu0 0
  %1500 = vmatprep.subr.bf16.mxu0 0
  %1501 = vmatpush1.bf16.msra.mxu0 0
  %1502 = vmatprep.subr.bf16.mxu0 0
  %1503 = vmatpush1.bf16.msra.mxu0 0
  %1504 = vmatprep.subr.bf16.mxu0 0
  %1505 = vmatpush1.bf16.msra.mxu0 0
  %1506 = vmatprep.subr.bf16.mxu0 0
  %1507 = vmatpush1.bf16.msra.mxu0 0
  %1508 = vmatprep.subr.bf16.mxu0 0
  %1509 = vmatpush1.bf16.msra.mxu0 0
  %1510 = vmatprep.subr.bf16.mxu0 0
  %1511 = vmatpush1.bf16.msra.mxu0 0
  %1512 = vmatprep.subr.bf16.mxu0 0
  %1513 = vmatpush1.bf16.msra.mxu0 0
  %1514 = vmatprep.subr.bf16.mxu0 0
  %1515 = vmatpush1.bf16.msra.mxu0 0
  %1516 = vmatprep.subr.bf16.mxu0 0
  %1517 = vmatpush1.bf16.msra.mxu0 0
  %1518 = vmatprep.subr.bf16.mxu0 0
  %1519 = vmatpush1.bf16.msra.mxu0 0
  %1520 = vmatprep.subr.bf16.mxu0 0
  %1521 = vmatpush1.bf16.msra.mxu0 0
  %1522 = vmatprep.subr.bf16.mxu0 0
  %1523 = vmatpush1.bf16.msra.mxu0 0
  %1524 = vmatprep.subr.bf16.mxu0 0
  %1525 = vmatpush1.bf16.msra.mxu0 0
  %1526 = vmatprep.mubr.bf16.mxu0 0
  %1527 = vmatmul.mubr.bf16.gmra.mrb[0].mxu0 %v1447
  %v1528 = vpop.f32.mrb[0].mxu0
  %v1529 = vadd.f32 %v1431, %v1528
  %v1530 = vpop.f32.mrb[0].mxu0
  %v1531 = vpop.f32.mrb[0].mxu0
  %v1532 = vadd.f32 %v1431, %v1531
  %v1533 = vpop.f32.mrb[0].mxu0
  %1534 = vmatprep.mubr.bf16.mxu0 0
  %1535 = vmatmul.mubr.bf16.gmra.mrb[0].mxu0 %v1450
  %v1536 = vpop.f32.mrb[0].mxu0
  %v1537 = vadd.f32 %v1431, %v1536
  %v1538 = vpop.f32.mrb[0].mxu0
  %v1539 = vpop.f32.mrb[0].mxu0
  %v1540 = vadd.f32 %v1431, %v1539
  %v1541 = vpop.f32.mrb[0].mxu0
  %1542 = vmatprep.mubr.bf16.mxu0 0
  %1543 = vmatmul.mubr.bf16.gmra.mrb[0].mxu0 %v1453
  %v1544 = vpop.f32.mrb[0].mxu0
  %v1545 = vadd.f32 %v1431, %v1544
  %v1546 = vpop.f32.mrb[0].mxu0
  %v1547 = vpop.f32.mrb[0].mxu0
  %v1548 = vadd.f32 %v1431, %v1547
  %v1549 = vpop.f32.mrb[0].mxu0
  %1550 = vmatprep.mubr.bf16.mxu0 0
  %1551 = vmatmul.mubr.bf16.gmra.mrb[0].mxu0 %v1456
  %v1552 = vpop.f32.mrb[0].mxu0
  %v1553 = vadd.f32 %v1431, %v1552
  %v1554 = vpop.f32.mrb[0].mxu0
  %v1555 = vpop.f32.mrb[0].mxu0
  %v1556 = vadd.f32 %v1431, %v1555
  %v1557 = vpop.f32.mrb[0].mxu0
  %1558 = vmatprep.mubr.bf16.mxu0 0
  %1559 = vmatmul.mubr.bf16.gmra.mrb[0].mxu0 %v1459
  %v1560 = vpop.f32.mrb[0].mxu0
  %v1561 = vadd.f32 %v1431, %v1560
  %v1562 = vpop.f32.mrb[0].mxu0
  %v1563 = vpop.f32.mrb[0].mxu0
  %v1564 = vadd.f32 %v1431, %v1563
  %v1565 = vpop.f32.mrb[0].mxu0
  %1566 = vmatprep.mubr.bf16.mxu0 0
  %1567 = vmatmul.mubr.bf16.gmra.mrb[0].mxu0 %v1462
  %v1568 = vpop.f32.mrb[0].mxu0
  %v1569 = vadd.f32 %v1431, %v1568
  %v1570 = vpop.f32.mrb[0].mxu0
  %v1571 = vpop.f32.mrb[0].mxu0
  %v1572 = vadd.f32 %v1431, %v1571
  %v1573 = vpop.f32.mrb[0].mxu0
  %1574 = vmatprep.mubr.bf16.mxu0 0
  %1575 = vmatmul.mubr.bf16.gmra.mrb[0].mxu0 %v1465
  %v1576 = vpop.f32.mrb[0].mxu0
  %v1577 = vadd.f32 %v1431, %v1576
  %v1578 = vpop.f32.mrb[0].mxu0
  %v1579 = vpop.f32.mrb[0].mxu0
  %v1580 = vadd.f32 %v1431, %v1579
  %v1581 = vpop.f32.mrb[0].mxu0
  %1582 = vmatprep.mubr.bf16.mxu0 0
  %1583 = vmatmul.mubr.bf16.gmra.mrb[0].mxu0 %v1468
  %v1584 = vpop.f32.mrb[0].mxu0
  %v1585 = vadd.f32 %v1431, %v1584
  %v1586 = vpop.f32.mrb[0].mxu0
  %v1587 = vpop.f32.mrb[0].mxu0
  %v1588 = vadd.f32 %v1431, %v1587
  %v1589 = vpop.f32.mrb[0].mxu0
  %1590 = vmatprep.mubr.bf16.mxu0 0
  %1591 = vmatmul.mubr.bf16.gmra.mrb[0].mxu0 %v1471
  %v1592 = vpop.f32.mrb[0].mxu0
  %v1593 = vadd.f32 %v1431, %v1592
  %v1594 = vpop.f32.mrb[0].mxu0
  %v1595 = vpop.f32.mrb[0].mxu0
  %v1596 = vadd.f32 %v1431, %v1595
  %v1597 = vpop.f32.mrb[0].mxu0
  %1598 = vmatprep.mubr.bf16.mxu0 0
  %1599 = vmatmul.mubr.bf16.gmra.mrb[0].mxu0 %v1474
  %v1600 = vpop.f32.mrb[0].mxu0
  %v1601 = vadd.f32 %v1431, %v1600
  %v1602 = vpop.f32.mrb[0].mxu0
  %v1603 = vpop.f32.mrb[0].mxu0
  %v1604 = vadd.f32 %v1431, %v1603
  %v1605 = vpop.f32.mrb[0].mxu0
  %1606 = vmatprep.mubr.bf16.mxu0 0
  %1607 = vmatmul.mubr.bf16.gmra.mrb[0].mxu0 %v1477
  %v1608 = vpop.f32.mrb[0].mxu0
  %v1609 = vadd.f32 %v1431, %v1608
  %v1610 = vpop.f32.mrb[0].mxu0
  %v1611 = vpop.f32.mrb[0].mxu0
  %v1612 = vadd.f32 %v1431, %v1611
  %v1613 = vpop.f32.mrb[0].mxu0
  %1614 = vmatprep.mubr.bf16.mxu0 0
  %1615 = vmatmul.mubr.bf16.gmra.mrb[0].mxu0 %v1480
  %v1616 = vpop.f32.mrb[0].mxu0
  %v1617 = vadd.f32 %v1431, %v1616
  %v1618 = vpop.f32.mrb[0].mxu0
  %v1619 = vpop.f32.mrb[0].mxu0
  %v1620 = vadd.f32 %v1431, %v1619
  %v1621 = vpop.f32.mrb[0].mxu0
  %1622 = vmatprep.mubr.bf16.mxu0 0
  %1623 = vmatmul.mubr.bf16.gmra.mrb[0].mxu0 %v1483
  %v1624 = vpop.f32.mrb[0].mxu0
  %v1625 = vadd.f32 %v1431, %v1624
  %v1626 = vpop.f32.mrb[0].mxu0
  %v1627 = vpop.f32.mrb[0].mxu0
  %v1628 = vadd.f32 %v1431, %v1627
  %v1629 = vpop.f32.mrb[0].mxu0
  %1630 = vmatprep.mubr.bf16.mxu0 0
  %1631 = vmatmul.mubr.bf16.gmra.mrb[0].mxu0 %v1486
  %v1632 = vpop.f32.mrb[0].mxu0
  %v1633 = vadd.f32 %v1431, %v1632
  %v1634 = vpop.f32.mrb[0].mxu0
  %v1635 = vpop.f32.mrb[0].mxu0
  %v1636 = vadd.f32 %v1431, %v1635
  %v1637 = vpop.f32.mrb[0].mxu0
  %1638 = vmatprep.mubr.bf16.mxu0 0
  %1639 = vmatmul.mubr.bf16.gmra.mrb[0].mxu0 %v1489
  %v1640 = vpop.f32.mrb[0].mxu0
  %v1641 = vadd.f32 %v1431, %v1640
  %v1642 = vpop.f32.mrb[0].mxu0
  %v1643 = vpop.f32.mrb[0].mxu0
  %v1644 = vadd.f32 %v1431, %v1643
  %v1645 = vpop.f32.mrb[0].mxu0
  %1646 = vmatprep.mubr.bf16.mxu0 0
  %1647 = vmatmul.mubr.bf16.gmra.mrb[0].mxu0 %v1492
  %v1648 = vpop.f32.mrb[0].mxu0
  %v1649 = vadd.f32 %v1431, %v1648
  %v1650 = vpop.f32.mrb[0].mxu0
  %v1651 = vpop.f32.mrb[0].mxu0
  %v1652 = vadd.f32 %v1431, %v1651
  %v1653 = vpop.f32.mrb[0].mxu0
  %1654 = vdwg.mxu0
  %v1655 = vmax.f32 %v1529, 0.0
  %v1656 = vmax.f32 %v1532, 0.0
  %v1657 = vmax.f32 %v1537, 0.0
  %v1658 = vmax.f32 %v1540, 0.0
  %v1659 = vmax.f32 %v1545, 0.0
  %v1660 = vmax.f32 %v1548, 0.0
  %v1661 = vmax.f32 %v1553, 0.0
  %v1662 = vmax.f32 %v1556, 0.0
  %v1663 = vmax.f32 %v1561, 0.0
  %v1664 = vmax.f32 %v1564, 0.0
  %v1665 = vmax.f32 %v1569, 0.0
  %v1666 = vmax.f32 %v1572, 0.0
  %v1667 = vmax.f32 %v1577, 0.0
  %v1668 = vmax.f32 %v1580, 0.0
  %v1669 = vmax.f32 %v1585, 0.0
  %v1670 = vmax.f32 %v1588, 0.0
  %v1671 = vmax.f32 %v1593, 0.0
  %v1672 = vmax.f32 %v1596, 0.0
  %v1673 = vmax.f32 %v1601, 0.0
  %v1674 = vmax.f32 %v1604, 0.0
  %v1675 = vmax.f32 %v1609, 0.0
  %v1676 = vmax.f32 %v1612, 0.0
  %v1677 = vmax.f32 %v1617, 0.0
  %v1678 = vmax.f32 %v1620, 0.0
  %v1679 = vmax.f32 %v1625, 0.0
  %v1680 = vmax.f32 %v1628, 0.0
  %v1681 = vmax.f32 %v1633, 0.0
  %v1682 = vmax.f32 %v1636, 0.0
  %v1683 = vmax.f32 %v1641, 0.0
  %v1684 = vmax.f32 %v1644, 0.0
  %v1685 = vmax.f32 %v1649, 0.0
  %v1686 = vmax.f32 %v1652, 0.0
  %v1687 = vpack.c.bf16 %v1656, %v1655
  %v1688 = vpack.c.bf16 %v1658, %v1657
  %v1689 = vpack.c.bf16 %v1660, %v1659
  %v1690 = vpack.c.bf16 %v1662, %v1661
  %v1691 = vpack.c.bf16 %v1664, %v1663
  %v1692 = vpack.c.bf16 %v1666, %v1665
  %v1693 = vpack.c.bf16 %v1668, %v1667
  %v1694 = vpack.c.bf16 %v1670, %v1669
  %v1695 = vpack.c.bf16 %v1672, %v1671
  %v1696 = vpack.c.bf16 %v1674, %v1673
  %v1697 = vpack.c.bf16 %v1676, %v1675
  %v1698 = vpack.c.bf16 %v1678, %v1677
  %v1699 = vpack.c.bf16 %v1680, %v1679
  %v1700 = vpack.c.bf16 %v1682, %v1681
  %v1701 = vpack.c.bf16 %v1684, %v1683
  %v1702 = vpack.c.bf16 %v1686, %v1685
  %v1703 = vld [vmem:[%s11] sm:$0xf]
  %v1704 = vld [vmem:[%s11 + $0x4] sm:$0xf]
  %v1705 = vld [vmem:[%s11 + $0x8] sm:$0xf]
  %v1706 = vld [vmem:[%s11 + $0xc] sm:$0xf]
  %v1707 = vld [vmem:[%s12] sm:$0x1]
  %v1709 = vlaneseq
  %v1710 = vshrl.u32 %v1709, 7
  %v1711 = vsub.s32 0, %v1710
  %v1712 = vrot.slane %v1707, %v1711
  %v1718 = vunpack.c.l.b16 %v1703
  %v1719 = vunpack.c.l.b16 %v1704
  %v1720 = vunpack.c.l.b16 %v1705
  %v1721 = vunpack.c.l.b16 %v1706
  %v1722 = vpack.c.b16 %v1719, %v1718
  %v1723 = vpack.c.b16 %v1721, %v1720
  %v1727 = vsel %vm1445, %v1687, 0
  %v1730 = vsel %vm1445, %v1688, 0
  %v1733 = vsel %vm1445, %v1689, 0
  %v1736 = vsel %vm1445, %v1690, 0
  %v1739 = vsel %vm1445, %v1691, 0
  %v1742 = vsel %vm1445, %v1692, 0
  %v1745 = vsel %vm1445, %v1693, 0
  %v1748 = vsel %vm1445, %v1694, 0
  %v1751 = vsel %vm1445, %v1695, 0
  %v1754 = vsel %vm1445, %v1696, 0
  %v1757 = vsel %vm1445, %v1697, 0
  %v1760 = vsel %vm1445, %v1698, 0
  %v1763 = vsel %vm1445, %v1699, 0
  %v1766 = vsel %vm1445, %v1700, 0
  %v1769 = vsel %vm1445, %v1701, 0
  %v1772 = vsel %vm1445, %v1702, 0
  %1774 = vmatprep.subr.bf16.mxu0 0
  %1775 = vmatpush1.bf16.msra.mxu0 %v1722
  %1776 = vmatprep.subr.bf16.mxu0 0
  %1777 = vmatpush1.bf16.msra.mxu0 %v1723
  %1778 = vmatprep.subr.bf16.mxu0 0
  %1779 = vmatpush1.bf16.msra.mxu0 0
  %1780 = vmatprep.subr.bf16.mxu0 0
  %1781 = vmatpush1.bf16.msra.mxu0 0
  %1782 = vmatprep.subr.bf16.mxu0 0
  %1783 = vmatpush1.bf16.msra.mxu0 0
  %1784 = vmatprep.subr.bf16.mxu0 0
  %1785 = vmatpush1.bf16.msra.mxu0 0
  %1786 = vmatprep.subr.bf16.mxu0 0
  %1787 = vmatpush1.bf16.msra.mxu0 0
  %1788 = vmatprep.subr.bf16.mxu0 0
  %1789 = vmatpush1.bf16.msra.mxu0 0
  %1790 = vmatprep.subr.bf16.mxu0 0
  %1791 = vmatpush1.bf16.msra.mxu0 0
  %1792 = vmatprep.subr.bf16.mxu0 0
  %1793 = vmatpush1.bf16.msra.mxu0 0
  %1794 = vmatprep.subr.bf16.mxu0 0
  %1795 = vmatpush1.bf16.msra.mxu0 0
  %1796 = vmatprep.subr.bf16.mxu0 0
  %1797 = vmatpush1.bf16.msra.mxu0 0
  %1798 = vmatprep.subr.bf16.mxu0 0
  %1799 = vmatpush1.bf16.msra.mxu0 0
  %1800 = vmatprep.subr.bf16.mxu0 0
  %1801 = vmatpush1.bf16.msra.mxu0 0
  %1802 = vmatprep.subr.bf16.mxu0 0
  %1803 = vmatpush1.bf16.msra.mxu0 0
  %1804 = vmatprep.subr.bf16.mxu0 0
  %1805 = vmatpush1.bf16.msra.mxu0 0
  %1806 = vmatprep.mubr.bf16.mxu0 0
  %1807 = vmatmul.mubr.bf16.gmra.mrb[0].mxu0 %v1727
  %v1808 = vpop.f32.mrb[0].mxu0
  %v1809 = vadd.f32 %v1712, %v1808
  %v1810 = vpop.f32.mrb[0].mxu0
  %v1811 = vpop.f32.mrb[0].mxu0
  %v1812 = vadd.f32 %v1712, %v1811
  %v1813 = vpop.f32.mrb[0].mxu0
  %1814 = vmatprep.mubr.bf16.mxu0 0
  %1815 = vmatmul.mubr.bf16.gmra.mrb[0].mxu0 %v1730
  %v1816 = vpop.f32.mrb[0].mxu0
  %v1817 = vadd.f32 %v1712, %v1816
  %v1818 = vpop.f32.mrb[0].mxu0
  %v1819 = vpop.f32.mrb[0].mxu0
  %v1820 = vadd.f32 %v1712, %v1819
  %v1821 = vpop.f32.mrb[0].mxu0
  %1822 = vmatprep.mubr.bf16.mxu0 0
  %1823 = vmatmul.mubr.bf16.gmra.mrb[0].mxu0 %v1733
  %v1824 = vpop.f32.mrb[0].mxu0
  %v1825 = vadd.f32 %v1712, %v1824
  %v1826 = vpop.f32.mrb[0].mxu0
  %v1827 = vpop.f32.mrb[0].mxu0
  %v1828 = vadd.f32 %v1712, %v1827
  %v1829 = vpop.f32.mrb[0].mxu0
  %1830 = vmatprep.mubr.bf16.mxu0 0
  %1831 = vmatmul.mubr.bf16.gmra.mrb[0].mxu0 %v1736
  %v1832 = vpop.f32.mrb[0].mxu0
  %v1833 = vadd.f32 %v1712, %v1832
  %v1834 = vpop.f32.mrb[0].mxu0
  %v1835 = vpop.f32.mrb[0].mxu0
  %v1836 = vadd.f32 %v1712, %v1835
  %v1837 = vpop.f32.mrb[0].mxu0
  %1838 = vmatprep.mubr.bf16.mxu0 0
  %1839 = vmatmul.mubr.bf16.gmra.mrb[0].mxu0 %v1739
  %v1840 = vpop.f32.mrb[0].mxu0
  %v1841 = vadd.f32 %v1712, %v1840
  %v1842 = vpop.f32.mrb[0].mxu0
  %v1843 = vpop.f32.mrb[0].mxu0
  %v1844 = vadd.f32 %v1712, %v1843
  %v1845 = vpop.f32.mrb[0].mxu0
  %1846 = vmatprep.mubr.bf16.mxu0 0
  %1847 = vmatmul.mubr.bf16.gmra.mrb[0].mxu0 %v1742
  %v1848 = vpop.f32.mrb[0].mxu0
  %v1849 = vadd.f32 %v1712, %v1848
  %v1850 = vpop.f32.mrb[0].mxu0
  %v1851 = vpop.f32.mrb[0].mxu0
  %v1852 = vadd.f32 %v1712, %v1851
  %v1853 = vpop.f32.mrb[0].mxu0
  %1854 = vmatprep.mubr.bf16.mxu0 0
  %1855 = vmatmul.mubr.bf16.gmra.mrb[0].mxu0 %v1745
  %v1856 = vpop.f32.mrb[0].mxu0
  %v1857 = vadd.f32 %v1712, %v1856
  %v1858 = vpop.f32.mrb[0].mxu0
  %v1859 = vpop.f32.mrb[0].mxu0
  %v1860 = vadd.f32 %v1712, %v1859
  %v1861 = vpop.f32.mrb[0].mxu0
  %1862 = vmatprep.mubr.bf16.mxu0 0
  %1863 = vmatmul.mubr.bf16.gmra.mrb[0].mxu0 %v1748
  %v1864 = vpop.f32.mrb[0].mxu0
  %v1865 = vadd.f32 %v1712, %v1864
  %v1866 = vpop.f32.mrb[0].mxu0
  %v1867 = vpop.f32.mrb[0].mxu0
  %v1868 = vadd.f32 %v1712, %v1867
  %v1869 = vpop.f32.mrb[0].mxu0
  %1870 = vmatprep.mubr.bf16.mxu0 0
  %1871 = vmatmul.mubr.bf16.gmra.mrb[0].mxu0 %v1751
  %v1872 = vpop.f32.mrb[0].mxu0
  %v1873 = vadd.f32 %v1712, %v1872
  %v1874 = vpop.f32.mrb[0].mxu0
  %v1875 = vpop.f32.mrb[0].mxu0
  %v1876 = vadd.f32 %v1712, %v1875
  %v1877 = vpop.f32.mrb[0].mxu0
  %1878 = vmatprep.mubr.bf16.mxu0 0
  %1879 = vmatmul.mubr.bf16.gmra.mrb[0].mxu0 %v1754
  %v1880 = vpop.f32.mrb[0].mxu0
  %v1881 = vadd.f32 %v1712, %v1880
  %v1882 = vpop.f32.mrb[0].mxu0
  %v1883 = vpop.f32.mrb[0].mxu0
  %v1884 = vadd.f32 %v1712, %v1883
  %v1885 = vpop.f32.mrb[0].mxu0
  %1886 = vmatprep.mubr.bf16.mxu0 0
  %1887 = vmatmul.mubr.bf16.gmra.mrb[0].mxu0 %v1757
  %v1888 = vpop.f32.mrb[0].mxu0
  %v1889 = vadd.f32 %v1712, %v1888
  %v1890 = vpop.f32.mrb[0].mxu0
  %v1891 = vpop.f32.mrb[0].mxu0
  %v1892 = vadd.f32 %v1712, %v1891
  %v1893 = vpop.f32.mrb[0].mxu0
  %1894 = vmatprep.mubr.bf16.mxu0 0
  %1895 = vmatmul.mubr.bf16.gmra.mrb[0].mxu0 %v1760
  %v1896 = vpop.f32.mrb[0].mxu0
  %v1897 = vadd.f32 %v1712, %v1896
  %v1898 = vpop.f32.mrb[0].mxu0
  %v1899 = vpop.f32.mrb[0].mxu0
  %v1900 = vadd.f32 %v1712, %v1899
  %v1901 = vpop.f32.mrb[0].mxu0
  %1902 = vmatprep.mubr.bf16.mxu0 0
  %1903 = vmatmul.mubr.bf16.gmra.mrb[0].mxu0 %v1763
  %v1904 = vpop.f32.mrb[0].mxu0
  %v1905 = vadd.f32 %v1712, %v1904
  %v1906 = vpop.f32.mrb[0].mxu0
  %v1907 = vpop.f32.mrb[0].mxu0
  %v1908 = vadd.f32 %v1712, %v1907
  %v1909 = vpop.f32.mrb[0].mxu0
  %1910 = vmatprep.mubr.bf16.mxu0 0
  %1911 = vmatmul.mubr.bf16.gmra.mrb[0].mxu0 %v1766
  %v1912 = vpop.f32.mrb[0].mxu0
  %v1913 = vadd.f32 %v1712, %v1912
  %v1914 = vpop.f32.mrb[0].mxu0
  %v1915 = vpop.f32.mrb[0].mxu0
  %v1916 = vadd.f32 %v1712, %v1915
  %v1917 = vpop.f32.mrb[0].mxu0
  %1918 = vmatprep.mubr.bf16.mxu0 0
  %1919 = vmatmul.mubr.bf16.gmra.mrb[0].mxu0 %v1769
  %v1920 = vpop.f32.mrb[0].mxu0
  %v1921 = vadd.f32 %v1712, %v1920
  %v1922 = vpop.f32.mrb[0].mxu0
  %v1923 = vpop.f32.mrb[0].mxu0
  %v1924 = vadd.f32 %v1712, %v1923
  %v1925 = vpop.f32.mrb[0].mxu0
  %1926 = vmatprep.mubr.bf16.mxu0 0
  %1927 = vmatmul.mubr.bf16.gmra.mrb[0].mxu0 %v1772
  %v1928 = vpop.f32.mrb[0].mxu0
  %v1929 = vadd.f32 %v1712, %v1928
  %v1930 = vpop.f32.mrb[0].mxu0
  %v1931 = vpop.f32.mrb[0].mxu0
  %v1932 = vadd.f32 %v1712, %v1931
  %v1933 = vpop.f32.mrb[0].mxu0
  %1934 = vdwg.mxu0
  %v1935 = vlaneseq
  %v1936 = vand.u32 %v1935, 127
  %vm1937 = vcmp.eq.s32.totalorder %v1936, 3
  %v1938 = vsel %vm1937, 1, 0
  %v1939 = vcvt.s32.f32 %v1938
  %v1940 = vmul.f32 %v784, %v1939
  %v1941 = vmul.f32 %v787, %v1939
  %v1942 = vmul.f32 %v790, %v1939
  %v1943 = vmul.f32 %v793, %v1939
  %v1944 = vmul.f32 %v796, %v1939
  %v1945 = vmul.f32 %v799, %v1939
  %v1946 = vmul.f32 %v802, %v1939
  %v1947 = vmul.f32 %v805, %v1939
  %v1948 = vmul.f32 %v808, %v1939
  %v1949 = vmul.f32 %v811, %v1939
  %v1950 = vmul.f32 %v814, %v1939
  %v1951 = vmul.f32 %v817, %v1939
  %v1952 = vmul.f32 %v820, %v1939
  %v1953 = vmul.f32 %v823, %v1939
  %v1954 = vmul.f32 %v826, %v1939
  %v1955 = vmul.f32 %v829, %v1939
  %v1956 = vmul.f32 %v832, %v1939
  %v1957 = vmul.f32 %v835, %v1939
  %v1958 = vmul.f32 %v838, %v1939
  %v1959 = vmul.f32 %v841, %v1939
  %v1960 = vmul.f32 %v844, %v1939
  %v1961 = vmul.f32 %v847, %v1939
  %v1962 = vmul.f32 %v850, %v1939
  %v1963 = vmul.f32 %v853, %v1939
  %v1964 = vmul.f32 %v856, %v1939
  %v1965 = vmul.f32 %v859, %v1939
  %v1966 = vmul.f32 %v862, %v1939
  %v1967 = vmul.f32 %v865, %v1939
  %v1968 = vmul.f32 %v868, %v1939
  %v1969 = vmul.f32 %v871, %v1939
  %v1970 = vmul.f32 %v874, %v1939
  %v1971 = vmul.f32 %v877, %v1939
  %v1972 = vadd.f32 %v1809, %v1940
  %v1973 = vadd.f32 %v1812, %v1941
  %v1974 = vadd.f32 %v1817, %v1942
  %v1975 = vadd.f32 %v1820, %v1943
  %v1976 = vadd.f32 %v1825, %v1944
  %v1977 = vadd.f32 %v1828, %v1945
  %v1978 = vadd.f32 %v1833, %v1946
  %v1979 = vadd.f32 %v1836, %v1947
  %v1980 = vadd.f32 %v1841, %v1948
  %v1981 = vadd.f32 %v1844, %v1949
  %v1982 = vadd.f32 %v1849, %v1950
  %v1983 = vadd.f32 %v1852, %v1951
  %v1984 = vadd.f32 %v1857, %v1952
  %v1985 = vadd.f32 %v1860, %v1953
  %v1986 = vadd.f32 %v1865, %v1954
  %v1987 = vadd.f32 %v1868, %v1955
  %v1988 = vadd.f32 %v1873, %v1956
  %v1989 = vadd.f32 %v1876, %v1957
  %v1990 = vadd.f32 %v1881, %v1958
  %v1991 = vadd.f32 %v1884, %v1959
  %v1992 = vadd.f32 %v1889, %v1960
  %v1993 = vadd.f32 %v1892, %v1961
  %v1994 = vadd.f32 %v1897, %v1962
  %v1995 = vadd.f32 %v1900, %v1963
  %v1996 = vadd.f32 %v1905, %v1964
  %v1997 = vadd.f32 %v1908, %v1965
  %v1998 = vadd.f32 %v1913, %v1966
  %v1999 = vadd.f32 %v1916, %v1967
  %v2000 = vadd.f32 %v1921, %v1968
  %v2001 = vadd.f32 %v1924, %v1969
  %v2002 = vadd.f32 %v1929, %v1970
  %v2003 = vadd.f32 %v1932, %v1971
  %vm2004 = vcmask 31744
  %2005 = vst.msk [vmem:[%s13] sm:$0xff] %vm2004, %v1972
  %2006 = vst.msk [vmem:[%s13 + $0x8] sm:$0xff] %vm2004, %v1973
  %2007 = vst.msk [vmem:[%s13 + $0x10] sm:$0xff] %vm2004, %v1974
  %2008 = vst.msk [vmem:[%s13 + $0x18] sm:$0xff] %vm2004, %v1975
  %2009 = vst.msk [vmem:[%s13 + $0x20] sm:$0xff] %vm2004, %v1976
  %2010 = vst.msk [vmem:[%s13 + $0x28] sm:$0xff] %vm2004, %v1977
  %2011 = vst.msk [vmem:[%s13 + $0x30] sm:$0xff] %vm2004, %v1978
  %2012 = vst.msk [vmem:[%s13 + $0x38] sm:$0xff] %vm2004, %v1979
  %2013 = vst.msk [vmem:[%s13 + $0x40] sm:$0xff] %vm2004, %v1980
  %2014 = vst.msk [vmem:[%s13 + $0x48] sm:$0xff] %vm2004, %v1981
  %2015 = vst.msk [vmem:[%s13 + $0x50] sm:$0xff] %vm2004, %v1982
  %2016 = vst.msk [vmem:[%s13 + $0x58] sm:$0xff] %vm2004, %v1983
  %2017 = vst.msk [vmem:[%s13 + $0x60] sm:$0xff] %vm2004, %v1984
  %2018 = vst.msk [vmem:[%s13 + $0x68] sm:$0xff] %vm2004, %v1985
  %2019 = vst.msk [vmem:[%s13 + $0x70] sm:$0xff] %vm2004, %v1986
  %2020 = vst.msk [vmem:[%s13 + $0x78] sm:$0xff] %vm2004, %v1987
  %2021 = vst.msk [vmem:[%s13 + $0x80] sm:$0xff] %vm2004, %v1988
  %2022 = vst.msk [vmem:[%s13 + $0x88] sm:$0xff] %vm2004, %v1989
  %2023 = vst.msk [vmem:[%s13 + $0x90] sm:$0xff] %vm2004, %v1990
  %2024 = vst.msk [vmem:[%s13 + $0x98] sm:$0xff] %vm2004, %v1991
  %2025 = vst.msk [vmem:[%s13 + $0xa0] sm:$0xff] %vm2004, %v1992
  %2026 = vst.msk [vmem:[%s13 + $0xa8] sm:$0xff] %vm2004, %v1993
  %2027 = vst.msk [vmem:[%s13 + $0xb0] sm:$0xff] %vm2004, %v1994
  %2028 = vst.msk [vmem:[%s13 + $0xb8] sm:$0xff] %vm2004, %v1995
  %2029 = vst.msk [vmem:[%s13 + $0xc0] sm:$0xff] %vm2004, %v1996
  %2030 = vst.msk [vmem:[%s13 + $0xc8] sm:$0xff] %vm2004, %v1997
  %2031 = vst.msk [vmem:[%s13 + $0xd0] sm:$0xff] %vm2004, %v1998
  %2032 = vst.msk [vmem:[%s13 + $0xd8] sm:$0xff] %vm2004, %v1999
  %2033 = vst.msk [vmem:[%s13 + $0xe0] sm:$0xff] %vm2004, %v2000
  %2034 = vst.msk [vmem:[%s13 + $0xe8] sm:$0xff] %vm2004, %v2001
  %2035 = vst.msk [vmem:[%s13 + $0xf0] sm:$0xff] %vm2004, %v2002
  %2036 = vst.msk [vmem:[%s13 + $0xf8] sm:$0xff] %vm2004, %v2003
  // Predicated region
  $region54: #{tpu_custom_call.1} parent=0 // pred_check
    _
  $region55: #{tpu_custom_call.1} parent=0 // pred_check_branch
    %2038 = sbr.rel (0) target = $region57
  $region56: #{tpu_custom_call.1} parent=0 // pred_region
    _
  $region57: #{tpu_custom_call.1} parent=0 // pred_fallthru
    _
  // Predicated region
  $region58: #{tpu_custom_call.1} parent=0 // pred_check
    _
  $region59: #{tpu_custom_call.1} parent=0 // pred_check_branch
    %2040 = sbr.rel (0) target = $region61
  $region60: #{tpu_custom_call.1} parent=0 // pred_region
    _
  $region61: #{tpu_custom_call.1} parent=0 // pred_fallthru
    _

</llo_original>
